<compile_context>
chip_gen: v5e
topology: v5e:2x2
jax: 0.10.0
libtpu: 0.0.40
codegen_flags: <defaults>
</compile_context>

<pallas_src>
import math

import jax
import jax.numpy as jnp
from jax.experimental import pallas as pl
from jax.experimental.pallas import tpu as pltpu

# ---- small config consistent with an ELECTRA-style encoder ----
BATCH = 2
SEQ = 8
HIDDEN = 32
NUM_HEADS = 2
HEAD_DIM = HIDDEN // NUM_HEADS
INTERMEDIATE = 64
NUM_LAYERS = 2
VOCAB = 128
TYPE_VOCAB = 2
MAX_POS = 16
NUM_LABELS = 4
NUM_LABELS_PADDED = 128          # lane-dense classifier output; sliced in the wrapper
LN_EPS = 1e-12
LVEC_WIDTH = 128                 # per-layer small vectors padded to one lane tile

# rows of the packed per-layer vector block (L, 8, 128)
_R_BQKV, _R_BO, _R_G1, _R_B1, _R_BI, _R_BF, _R_G2, _R_B2 = range(8)


def _vmem_spec():
    return pl.BlockSpec(memory_space=pltpu.MemorySpace.VMEM)


def _ln(x, g, b):
    mu = jnp.mean(x, axis=-1, keepdims=True)
    var = jnp.mean((x - mu) ** 2, axis=-1, keepdims=True)
    return (x - mu) * jax.lax.rsqrt(var + LN_EPS) * g + b


# ---------------- fused forward kernel ----------------

def fused_electra_kernel(emb_ref, embln_ref, bias_ref,
                         wqkv_ref, wo_ref, wi_ref, wf_ref, lvec_ref,
                         cw1_ref, cw2_ref, cw3_ref, cw4_ref, cb_ref,
                         o_ref):
    f32, bf16 = jnp.float32, jnp.bfloat16
    B, S, H, NH, HD, I = BATCH, SEQ, HIDDEN, NUM_HEADS, HEAD_DIM, INTERMEDIATE
    BS = B * S

    # embeddings: gather+add done in the wrapper; LayerNorm fused here.
    x = _ln(emb_ref[...], embln_ref[0:1, :], embln_ref[1:2, :])        # (BS, H) f32

    # additive attention-mask bias, hoisted out of the layer loop
    bias3 = bias_ref[...][:, None, :]                                   # (B, 1, S)
    scale = 1.0 / math.sqrt(HD)

    for l in range(NUM_LAYERS):
        lv = lvec_ref[l]                                                # (8, 128) f32
        bqkv = lv[_R_BQKV:_R_BQKV + 1, :3 * H]
        bo   = lv[_R_BO:_R_BO + 1, :H]
        g1   = lv[_R_G1:_R_G1 + 1, :H]
        b1   = lv[_R_B1:_R_B1 + 1, :H]
        bi   = lv[_R_BI:_R_BI + 1, :I]
        bfo  = lv[_R_BF:_R_BF + 1, :H]
        g2   = lv[_R_G2:_R_G2 + 1, :H]
        b2   = lv[_R_B2:_R_B2 + 1, :H]

        # fused QKV projection: one MXU issue per layer
        qkv = jnp.dot(x.astype(bf16), wqkv_ref[l],
                      preferred_element_type=f32) + bqkv                # (BS, 3H)

        # per-head attention (NH=2). No lane concat of heads: the head merge is a
        # sum of per-head (HD,H) matmuls against the pre-split Wo blocks.
        attn = jnp.zeros((BS, H), f32)
        for n in range(NH):
            q = qkv[:, 0 * H + n * HD:0 * H + (n + 1) * HD].reshape(B, S, HD)
            k = qkv[:, 1 * H + n * HD:1 * H + (n + 1) * HD].reshape(B, S, HD)
            v = qkv[:, 2 * H + n * HD:2 * H + (n + 1) * HD].reshape(B, S, HD)

            s = jnp.einsum('bqd,bkd->bqk', q.astype(bf16), k.astype(bf16),
                           preferred_element_type=f32) * scale + bias3
            m = jnp.max(s, axis=-1, keepdims=True)
            p = jnp.exp(s - m)
            p = p * pl.reciprocal(jnp.sum(p, axis=-1, keepdims=True), approx=True)

            ctx = jnp.einsum('bqk,bkd->bqd', p.astype(bf16), v.astype(bf16),
                             preferred_element_type=f32)                # (B, S, HD)
            attn = attn + jnp.dot(ctx.reshape(BS, HD).astype(bf16), wo_ref[l, n],
                                  preferred_element_type=f32)

        h1 = _ln(x + attn + bo, g1, b1)

        # TODO(synk): HF ELECTRA uses exact erf-GELU; tanh approximation used here.
        inter = jax.nn.gelu(jnp.dot(h1.astype(bf16), wi_ref[l],
                                    preferred_element_type=f32) + bi,
                            approximate=True)
        ffn = jnp.dot(inter.astype(bf16), wf_ref[l],
                      preferred_element_type=f32) + bfo
        x = _ln(h1 + ffn, g2, b2)

    # Classifier run on all BS rows -> full-tile (16,128) lane-dense store; the CLS
    # row (s == 0) and real labels are selected in the wrapper.
    h = jnp.maximum(jnp.dot(x.astype(bf16), cw1_ref[...],
                            preferred_element_type=f32) + cb_ref[0:1, :512], 0.0)
    h = jnp.maximum(jnp.dot(h.astype(bf16), cw2_ref[...],
                            preferred_element_type=f32) + cb_ref[1:2, :256], 0.0)
    h = jnp.maximum(jnp.dot(h.astype(bf16), cw3_ref[...],
                            preferred_element_type=f32) + cb_ref[2:3, :128], 0.0)
    o_ref[...] = jnp.dot(h.astype(bf16), cw4_ref[...],
                         preferred_element_type=f32) + cb_ref[3:4, :NUM_LABELS_PADDED]


# ---------------- parameters (deterministic synthetic init) ----------------

def init_params(key):
    it = iter(jax.random.split(key, 256))

    def nrm(shape, scale=0.02):
        return jax.random.normal(next(it), shape, jnp.float32) * scale

    zeros = lambda s: jnp.zeros(s, jnp.float32)
    ones = lambda s: jnp.ones(s, jnp.float32)

    params = {
        'word_emb': nrm((VOCAB, HIDDEN)),
        'pos_emb': nrm((MAX_POS, HIDDEN)),
        'type_emb': nrm((TYPE_VOCAB, HIDDEN)),
        'emb_ln_g': ones((1, HIDDEN)),
        'emb_ln_b': zeros((1, HIDDEN)),
        'layers': [],
    }
    for _ in range(NUM_LAYERS):
        params['layers'].append((
            nrm((HIDDEN, HIDDEN)), zeros((1, HIDDEN)),               # Wq, bq
            nrm((HIDDEN, HIDDEN)), zeros((1, HIDDEN)),               # Wk, bk
            nrm((HIDDEN, HIDDEN)), zeros((1, HIDDEN)),               # Wv, bv
            nrm((HIDDEN, HIDDEN)), zeros((1, HIDDEN)),               # Wo, bo
            ones((1, HIDDEN)), zeros((1, HIDDEN)),                   # LN1 gamma, beta
            nrm((HIDDEN, INTERMEDIATE)), zeros((1, INTERMEDIATE)),   # FFN in
            nrm((INTERMEDIATE, HIDDEN)), zeros((1, HIDDEN)),         # FFN out
            ones((1, HIDDEN)), zeros((1, HIDDEN)),                   # LN2 gamma, beta
        ))
    params['cls'] = (
        nrm((HIDDEN, 512)), zeros((1, 512)),
        nrm((512, 256)), zeros((1, 256)),
        nrm((256, 128)), zeros((1, 128)),
        nrm((128, NUM_LABELS)), zeros((1, NUM_LABELS)),
    )
    return params


def _pad_row(v, width=LVEC_WIDTH):
    return jnp.pad(v, ((0, 0), (0, width - v.shape[1])))


def prepack_params(params):
    """One-time weight packing/casting/padding (hoisted out of the forward hot path)."""
    bf16 = jnp.bfloat16
    wqkv, wo, wi, wf, lvec = [], [], [], [], []
    for (Wq, bq, Wk, bk, Wv, bv, Wo, bo, g1, b1,
         Wi, bi, Wf, bf_, g2, b2) in params['layers']:
        wqkv.append(jnp.concatenate([Wq, Wk, Wv], axis=1))             # (H, 3H)
        wo.append(Wo.reshape(NUM_HEADS, HEAD_DIM, HIDDEN))              # (NH, HD, H)
        wi.append(Wi)
        wf.append(Wf)
        lvec.append(jnp.concatenate(
            [_pad_row(jnp.concatenate([bq, bk, bv], axis=1)),
             _pad_row(bo), _pad_row(g1), _pad_row(b1),
             _pad_row(bi), _pad_row(bf_), _pad_row(g2), _pad_row(b2)], axis=0))

    (w1, b1c, w2, b2c, w3, b3c, w4, b4c) = params['cls']
    w4p = jnp.zeros((w4.shape[0], NUM_LABELS_PADDED), jnp.float32).at[:, :NUM_LABELS].set(w4)
    b4p = jnp.zeros((1, NUM_LABELS_PADDED), jnp.float32).at[:, :NUM_LABELS].set(b4c)
    cls_b = jnp.concatenate([_pad_row(b1c, 512), _pad_row(b2c, 512),
                             _pad_row(b3c, 512), _pad_row(b4p, 512)], axis=0)  # (4, 512)

    return {
        'word_emb': params['word_emb'],
        'pos_emb': params['pos_emb'],
        'type_emb': params['type_emb'],
        'emb_ln': jnp.concatenate([params['emb_ln_g'], params['emb_ln_b']], axis=0),
        'wqkv': jnp.stack(wqkv).astype(bf16),        # (L, H, 3H)
        'wo': jnp.stack(wo).astype(bf16),            # (L, NH, HD, H)
        'wi': jnp.stack(wi).astype(bf16),            # (L, H, I)
        'wf': jnp.stack(wf).astype(bf16),            # (L, I, H)
        'lvec': jnp.stack(lvec),                     # (L, 8, 128) f32
        'cw1': w1.astype(bf16), 'cw2': w2.astype(bf16),
        'cw3': w3.astype(bf16), 'cw4': w4p.astype(bf16),
        'cls_b': cls_b,
    }


# ---------------- forward (mirrors ElectraForCustomClassification.forward) ----------------

def electra_for_custom_classification(packed, input_ids,
                                      attention_mask=None, token_type_ids=None):
    B, S = input_ids.shape
    H = HIDDEN
    if attention_mask is None:
        attention_mask = jnp.ones((B, S), jnp.int32)
    if token_type_ids is None:
        token_type_ids = jnp.zeros((B, S), jnp.int32)

    # Embedding lookups are gathers -> plain-JAX glue; everything else is fused.
    emb = (packed['word_emb'][input_ids]
           + packed['pos_emb'][:S][None, :, :]
           + packed['type_emb'][token_type_ids]).reshape(B * S, H)
    bias = (1.0 - attention_mask.astype(jnp.float32)) * -1e9            # (B, S)

    args = (emb, packed['emb_ln'], bias,
            packed['wqkv'], packed['wo'], packed['wi'], packed['wf'], packed['lvec'],
            packed['cw1'], packed['cw2'], packed['cw3'], packed['cw4'], packed['cls_b'])

    bytes_accessed = int(sum(a.size * a.dtype.itemsize for a in args)
                         + B * S * NUM_LABELS_PADDED * 4)
    flops = int(
        NUM_LAYERS * (2 * B * S * H * 3 * H
                      + NUM_HEADS * (4 * B * S * S * HEAD_DIM + 2 * B * S * HEAD_DIM * H)
                      + 4 * B * S * H * INTERMEDIATE)
        + 2 * B * S * (H * 512 + 512 * 256 + 256 * 128 + 128 * NUM_LABELS_PADDED))
    transcendentals = int(NUM_LAYERS * (NUM_HEADS * B * S * S + B * S * INTERMEDIATE))

    # Gridless single call: all packed weights (<1 MB) + activations (~KBs) are
    # VMEM-resident.
    # TODO(synk): at real ELECTRA sizes (H=768, S=512, L=12) stream per-layer weights
    # from HBM with BlockSpec + pipeline_mode=pl.Buffered(2-3) and add a "parallel"
    # batch grid axis (v7x: 64 MiB VMEM, 2 TensorCores).
    logits_all = pl.pallas_call(
        fused_electra_kernel,
        out_shape=jax.ShapeDtypeStruct((B * S, NUM_LABELS_PADDED), jnp.float32),
        in_specs=[_vmem_spec()] * len(args),
        out_specs=_vmem_spec(),
        compiler_params=pltpu.CompilerParams(vmem_limit_bytes=8 * 1024 * 1024),
        cost_estimate=pl.CostEstimate(flops=flops, transcendentals=transcendentals,
                                      bytes_accessed=bytes_accessed),
    )(*args)

    # pooled = last_hidden_state[:, 0, :]; classifier ran on all rows, select CLS row
    # and the real label lanes here.
    return logits_all.reshape(B, S, NUM_LABELS_PADDED)[:, 0, :NUM_LABELS]


if __name__ == "__main__":
    key = jax.random.PRNGKey(0)
    pkey, ikey = jax.random.split(key)
    packed = prepack_params(init_params(pkey))     # one-time prepack, not in hot path

    input_ids = jax.random.randint(ikey, (BATCH, SEQ), 0, VOCAB, dtype=jnp.int32)
    attention_mask = jnp.array([[1] * SEQ, [1] * (SEQ - 2) + [0, 0]], jnp.int32)
    token_type_ids = jnp.zeros((BATCH, SEQ), jnp.int32)

    fwd = jax.jit(electra_for_custom_classification)
    logits = jax.block_until_ready(fwd(packed, input_ids, attention_mask, token_type_ids))

    assert logits.shape == (BATCH, NUM_LABELS)
    assert bool(jnp.all(jnp.isfinite(logits)))
    print("KERNEL_OK")
</pallas_src>

<mosaic_0001>
module attributes {stable_mosaic.version = 11 : i64} {
  func.func @fused_electra_kernel(%arg0: memref<16x32xf32, #tpu.memory_space<vmem>>, %arg1: memref<2x32xf32, #tpu.memory_space<vmem>>, %arg2: memref<2x8xf32, #tpu.memory_space<vmem>>, %arg3: memref<2x32x96xbf16, #tpu.memory_space<vmem>>, %arg4: memref<2x2x16x32xbf16, #tpu.memory_space<vmem>>, %arg5: memref<2x32x64xbf16, #tpu.memory_space<vmem>>, %arg6: memref<2x64x32xbf16, #tpu.memory_space<vmem>>, %arg7: memref<2x8x128xf32, #tpu.memory_space<vmem>>, %arg8: memref<32x512xbf16, #tpu.memory_space<vmem>>, %arg9: memref<512x256xbf16, #tpu.memory_space<vmem>>, %arg10: memref<256x128xbf16, #tpu.memory_space<vmem>>, %arg11: memref<128x128xbf16, #tpu.memory_space<vmem>>, %arg12: memref<4x512xf32, #tpu.memory_space<vmem>>, %arg13: memref<16x128xf32, #tpu.memory_space<vmem>>) attributes {dimension_semantics = [], scalar_prefetch = 0 : i64, scratch_operands = 0 : i64, tpu.core_type = #tpu.core_type<tc>} {
    %c0 = arith.constant 0 : index
    %c0_0 = arith.constant 0 : index
    %0 = vector.load %arg0[%c0, %c0_0] : memref<16x32xf32, #tpu.memory_space<vmem>>, vector<16x32xf32>
    %c0_1 = arith.constant 0 : index
    %c0_2 = arith.constant 0 : index
    %1 = vector.load %arg1[%c0_1, %c0_2] : memref<2x32xf32, #tpu.memory_space<vmem>>, vector<1x32xf32>
    %c1 = arith.constant 1 : index
    %c0_3 = arith.constant 0 : index
    %2 = vector.load %arg1[%c1, %c0_3] : memref<2x32xf32, #tpu.memory_space<vmem>>, vector<1x32xf32>
    %cst = arith.constant dense<0.000000e+00> : vector<16xf32>
    %3 = vector.multi_reduction <add>, %0, %cst [1] : vector<16x32xf32> to vector<16xf32>
    %4 = vector.shape_cast %3 : vector<16xf32> to vector<16x1xf32>
    %cst_4 = arith.constant 3.200000e+01 : f32
    %5 = vector.broadcast %cst_4 : f32 to vector<16x1xf32>
    %6 = arith.divf %4, %5 : vector<16x1xf32>
    %7 = vector.broadcast %6 : vector<16x1xf32> to vector<16x32xf32>
    %8 = arith.subf %0, %7 : vector<16x32xf32>
    %9 = arith.mulf %8, %8 : vector<16x32xf32>
    %cst_5 = arith.constant dense<0.000000e+00> : vector<16xf32>
    %10 = vector.multi_reduction <add>, %9, %cst_5 [1] : vector<16x32xf32> to vector<16xf32>
    %11 = vector.shape_cast %10 : vector<16xf32> to vector<16x1xf32>
    %cst_6 = arith.constant 3.200000e+01 : f32
    %12 = vector.broadcast %cst_6 : f32 to vector<16x1xf32>
    %13 = arith.divf %11, %12 : vector<16x1xf32>
    %14 = vector.broadcast %6 : vector<16x1xf32> to vector<16x32xf32>
    %15 = arith.subf %0, %14 : vector<16x32xf32>
    %cst_7 = arith.constant 9.99999996E-13 : f32
    %16 = vector.broadcast %cst_7 : f32 to vector<16x1xf32>
    %17 = arith.addf %13, %16 : vector<16x1xf32>
    %18 = math.rsqrt %17 : vector<16x1xf32>
    %19 = vector.broadcast %18 : vector<16x1xf32> to vector<16x32xf32>
    %20 = arith.mulf %15, %19 : vector<16x32xf32>
    %21 = vector.broadcast %1 : vector<1x32xf32> to vector<16x32xf32>
    %22 = arith.mulf %20, %21 : vector<16x32xf32>
    %23 = vector.broadcast %2 : vector<1x32xf32> to vector<16x32xf32>
    %24 = arith.addf %22, %23 : vector<16x32xf32>
    %c0_8 = arith.constant 0 : index
    %c0_9 = arith.constant 0 : index
    %25 = vector.load %arg2[%c0_8, %c0_9] : memref<2x8xf32, #tpu.memory_space<vmem>>, vector<2x8xf32>
    %26 = vector.shape_cast %25 : vector<2x8xf32> to vector<2x1x8xf32>
    %c0_10 = arith.constant 0 : index
    %c0_11 = arith.constant 0 : index
    %c0_12 = arith.constant 0 : index
    %27 = vector.load %arg7[%c0_10, %c0_11, %c0_12] : memref<2x8x128xf32, #tpu.memory_space<vmem>>, vector<1x8x128xf32>
    %28 = vector.shape_cast %27 : vector<1x8x128xf32> to vector<8x128xf32>
    %29 = vector.extract_strided_slice %28 {offsets = [0, 0], sizes = [1, 96], strides = [1, 1]} : vector<8x128xf32> to vector<1x96xf32>
    %30 = vector.extract_strided_slice %28 {offsets = [1, 0], sizes = [1, 32], strides = [1, 1]} : vector<8x128xf32> to vector<1x32xf32>
    %31 = vector.extract_strided_slice %28 {offsets = [2, 0], sizes = [1, 32], strides = [1, 1]} : vector<8x128xf32> to vector<1x32xf32>
    %32 = vector.extract_strided_slice %28 {offsets = [3, 0], sizes = [1, 32], strides = [1, 1]} : vector<8x128xf32> to vector<1x32xf32>
    %33 = vector.extract_strided_slice %28 {offsets = [4, 0], sizes = [1, 64], strides = [1, 1]} : vector<8x128xf32> to vector<1x64xf32>
    %34 = vector.extract_strided_slice %28 {offsets = [5, 0], sizes = [1, 32], strides = [1, 1]} : vector<8x128xf32> to vector<1x32xf32>
    %35 = vector.extract_strided_slice %28 {offsets = [6, 0], sizes = [1, 32], strides = [1, 1]} : vector<8x128xf32> to vector<1x32xf32>
    %36 = vector.extract_strided_slice %28 {offsets = [7, 0], sizes = [1, 32], strides = [1, 1]} : vector<8x128xf32> to vector<1x32xf32>
    %37 = arith.truncf %24 : vector<16x32xf32> to vector<16x32xbf16>
    %c0_13 = arith.constant 0 : index
    %c0_14 = arith.constant 0 : index
    %c0_15 = arith.constant 0 : index
    %38 = vector.load %arg3[%c0_13, %c0_14, %c0_15] : memref<2x32x96xbf16, #tpu.memory_space<vmem>>, vector<1x32x96xbf16>
    %39 = vector.shape_cast %38 : vector<1x32x96xbf16> to vector<32x96xbf16>
    %cst_16 = arith.constant dense<0.000000e+00> : vector<16x96xf32>
    %40 = tpu.matmul %37, %39, %cst_16 {dimension_numbers = #tpu.dot_dimension_numbers<[1], [0], [0], [1], [0, 0, 1, 1], [], []>} : vector<16x32xbf16>, vector<32x96xbf16>, vector<16x96xf32> -> vector<16x96xf32>
    %41 = vector.broadcast %29 : vector<1x96xf32> to vector<16x96xf32>
    %42 = arith.addf %40, %41 : vector<16x96xf32>
    %cst_17 = arith.constant 0.000000e+00 : f32
    %43 = vector.broadcast %cst_17 : f32 to vector<16x32xf32>
    %44 = vector.extract_strided_slice %42 {offsets = [0, 0], sizes = [16, 16], strides = [1, 1]} : vector<16x96xf32> to vector<16x16xf32>
    %45 = vector.shape_cast %44 : vector<16x16xf32> to vector<2x8x16xf32>
    %46 = vector.extract_strided_slice %42 {offsets = [0, 32], sizes = [16, 16], strides = [1, 1]} : vector<16x96xf32> to vector<16x16xf32>
    %47 = vector.shape_cast %46 : vector<16x16xf32> to vector<2x8x16xf32>
    %48 = vector.extract_strided_slice %42 {offsets = [0, 64], sizes = [16, 16], strides = [1, 1]} : vector<16x96xf32> to vector<16x16xf32>
    %49 = vector.shape_cast %48 : vector<16x16xf32> to vector<2x8x16xf32>
    %50 = arith.truncf %45 : vector<2x8x16xf32> to vector<2x8x16xbf16>
    %51 = arith.truncf %47 : vector<2x8x16xf32> to vector<2x8x16xbf16>
    "tpu.trace_start"() <{level = 10 : i32, message = "bqd,bkd->bqk"}> : () -> ()
    %cst_18 = arith.constant dense<0.000000e+00> : vector<2x8x8xf32>
    %52 = tpu.matmul %50, %51, %cst_18 {dimension_numbers = #tpu.dot_dimension_numbers<[2], [2], [1], [1], [0, 0, 0, 1, 1, 1], [0], [0]>} : vector<2x8x16xbf16>, vector<2x8x16xbf16>, vector<2x8x8xf32> -> vector<2x8x8xf32>
    "tpu.trace_stop"() : () -> ()
    %cst_19 = arith.constant 2.500000e-01 : f32
    %53 = vector.broadcast %cst_19 : f32 to vector<2x8x8xf32>
    %54 = arith.mulf %52, %53 : vector<2x8x8xf32>
    %55 = vector.broadcast %26 : vector<2x1x8xf32> to vector<2x8x8xf32>
    %56 = arith.addf %54, %55 : vector<2x8x8xf32>
    %cst_20 = arith.constant dense<0xFF800000> : vector<2x8xf32>
    %57 = vector.multi_reduction <maximumf>, %56, %cst_20 [2] : vector<2x8x8xf32> to vector<2x8xf32>
    %58 = vector.shape_cast %57 : vector<2x8xf32> to vector<2x8x1xf32>
    %59 = vector.broadcast %58 : vector<2x8x1xf32> to vector<2x8x8xf32>
    %60 = arith.subf %56, %59 : vector<2x8x8xf32>
    %61 = math.exp %60 : vector<2x8x8xf32>
    %cst_21 = arith.constant dense<0.000000e+00> : vector<2x8xf32>
    %62 = vector.multi_reduction <add>, %61, %cst_21 [2] : vector<2x8x8xf32> to vector<2x8xf32>
    %63 = vector.shape_cast %62 : vector<2x8xf32> to vector<2x8x1xf32>
    %64 = tpu.reciprocal %63 {approx = true} : vector<2x8x1xf32> -> vector<2x8x1xf32>
    %65 = vector.broadcast %64 : vector<2x8x1xf32> to vector<2x8x8xf32>
    %66 = arith.mulf %61, %65 : vector<2x8x8xf32>
    %67 = arith.truncf %66 : vector<2x8x8xf32> to vector<2x8x8xbf16>
    %68 = arith.truncf %49 : vector<2x8x16xf32> to vector<2x8x16xbf16>
    "tpu.trace_start"() <{level = 10 : i32, message = "bqk,bkd->bqd"}> : () -> ()
    %cst_22 = arith.constant dense<0.000000e+00> : vector<2x8x16xf32>
    %69 = tpu.matmul %67, %68, %cst_22 {dimension_numbers = #tpu.dot_dimension_numbers<[2], [1], [1], [2], [0, 0, 0, 1, 1, 2], [0], [0]>} : vector<2x8x8xbf16>, vector<2x8x16xbf16>, vector<2x8x16xf32> -> vector<2x8x16xf32>
    "tpu.trace_stop"() : () -> ()
    %70 = vector.shape_cast %69 : vector<2x8x16xf32> to vector<16x16xf32>
    %71 = arith.truncf %70 : vector<16x16xf32> to vector<16x16xbf16>
    %c0_23 = arith.constant 0 : index
    %c0_24 = arith.constant 0 : index
    %c0_25 = arith.constant 0 : index
    %c0_26 = arith.constant 0 : index
    %72 = vector.load %arg4[%c0_23, %c0_24, %c0_25, %c0_26] : memref<2x2x16x32xbf16, #tpu.memory_space<vmem>>, vector<1x1x16x32xbf16>
    %73 = vector.shape_cast %72 : vector<1x1x16x32xbf16> to vector<16x32xbf16>
    %cst_27 = arith.constant dense<0.000000e+00> : vector<16x32xf32>
    %74 = tpu.matmul %71, %73, %cst_27 {dimension_numbers = #tpu.dot_dimension_numbers<[1], [0], [0], [1], [0, 0, 1, 1], [], []>} : vector<16x16xbf16>, vector<16x32xbf16>, vector<16x32xf32> -> vector<16x32xf32>
    %75 = arith.addf %43, %74 : vector<16x32xf32>
    %76 = vector.extract_strided_slice %42 {offsets = [0, 16], sizes = [16, 16], strides = [1, 1]} : vector<16x96xf32> to vector<16x16xf32>
    %77 = vector.shape_cast %76 : vector<16x16xf32> to vector<2x8x16xf32>
    %78 = vector.extract_strided_slice %42 {offsets = [0, 48], sizes = [16, 16], strides = [1, 1]} : vector<16x96xf32> to vector<16x16xf32>
    %79 = vector.shape_cast %78 : vector<16x16xf32> to vector<2x8x16xf32>
    %80 = vector.extract_strided_slice %42 {offsets = [0, 80], sizes = [16, 16], strides = [1, 1]} : vector<16x96xf32> to vector<16x16xf32>
    %81 = vector.shape_cast %80 : vector<16x16xf32> to vector<2x8x16xf32>
    %82 = arith.truncf %77 : vector<2x8x16xf32> to vector<2x8x16xbf16>
    %83 = arith.truncf %79 : vector<2x8x16xf32> to vector<2x8x16xbf16>
    "tpu.trace_start"() <{level = 10 : i32, message = "bqd,bkd->bqk"}> : () -> ()
    %cst_28 = arith.constant dense<0.000000e+00> : vector<2x8x8xf32>
    %84 = tpu.matmul %82, %83, %cst_28 {dimension_numbers = #tpu.dot_dimension_numbers<[2], [2], [1], [1], [0, 0, 0, 1, 1, 1], [0], [0]>} : vector<2x8x16xbf16>, vector<2x8x16xbf16>, vector<2x8x8xf32> -> vector<2x8x8xf32>
    "tpu.trace_stop"() : () -> ()
    %cst_29 = arith.constant 2.500000e-01 : f32
    %85 = vector.broadcast %cst_29 : f32 to vector<2x8x8xf32>
    %86 = arith.mulf %84, %85 : vector<2x8x8xf32>
    %87 = vector.broadcast %26 : vector<2x1x8xf32> to vector<2x8x8xf32>
    %88 = arith.addf %86, %87 : vector<2x8x8xf32>
    %cst_30 = arith.constant dense<0xFF800000> : vector<2x8xf32>
    %89 = vector.multi_reduction <maximumf>, %88, %cst_30 [2] : vector<2x8x8xf32> to vector<2x8xf32>
    %90 = vector.shape_cast %89 : vector<2x8xf32> to vector<2x8x1xf32>
    %91 = vector.broadcast %90 : vector<2x8x1xf32> to vector<2x8x8xf32>
    %92 = arith.subf %88, %91 : vector<2x8x8xf32>
    %93 = math.exp %92 : vector<2x8x8xf32>
    %cst_31 = arith.constant dense<0.000000e+00> : vector<2x8xf32>
    %94 = vector.multi_reduction <add>, %93, %cst_31 [2] : vector<2x8x8xf32> to vector<2x8xf32>
    %95 = vector.shape_cast %94 : vector<2x8xf32> to vector<2x8x1xf32>
    %96 = tpu.reciprocal %95 {approx = true} : vector<2x8x1xf32> -> vector<2x8x1xf32>
    %97 = vector.broadcast %96 : vector<2x8x1xf32> to vector<2x8x8xf32>
    %98 = arith.mulf %93, %97 : vector<2x8x8xf32>
    %99 = arith.truncf %98 : vector<2x8x8xf32> to vector<2x8x8xbf16>
    %100 = arith.truncf %81 : vector<2x8x16xf32> to vector<2x8x16xbf16>
    "tpu.trace_start"() <{level = 10 : i32, message = "bqk,bkd->bqd"}> : () -> ()
    %cst_32 = arith.constant dense<0.000000e+00> : vector<2x8x16xf32>
    %101 = tpu.matmul %99, %100, %cst_32 {dimension_numbers = #tpu.dot_dimension_numbers<[2], [1], [1], [2], [0, 0, 0, 1, 1, 2], [0], [0]>} : vector<2x8x8xbf16>, vector<2x8x16xbf16>, vector<2x8x16xf32> -> vector<2x8x16xf32>
    "tpu.trace_stop"() : () -> ()
    %102 = vector.shape_cast %101 : vector<2x8x16xf32> to vector<16x16xf32>
    %103 = arith.truncf %102 : vector<16x16xf32> to vector<16x16xbf16>
    %c0_33 = arith.constant 0 : index
    %c1_34 = arith.constant 1 : index
    %c0_35 = arith.constant 0 : index
    %c0_36 = arith.constant 0 : index
    %104 = vector.load %arg4[%c0_33, %c1_34, %c0_35, %c0_36] : memref<2x2x16x32xbf16, #tpu.memory_space<vmem>>, vector<1x1x16x32xbf16>
    %105 = vector.shape_cast %104 : vector<1x1x16x32xbf16> to vector<16x32xbf16>
    %cst_37 = arith.constant dense<0.000000e+00> : vector<16x32xf32>
    %106 = tpu.matmul %103, %105, %cst_37 {dimension_numbers = #tpu.dot_dimension_numbers<[1], [0], [0], [1], [0, 0, 1, 1], [], []>} : vector<16x16xbf16>, vector<16x32xbf16>, vector<16x32xf32> -> vector<16x32xf32>
    %107 = arith.addf %75, %106 : vector<16x32xf32>
    %108 = arith.addf %24, %107 : vector<16x32xf32>
    %109 = vector.broadcast %30 : vector<1x32xf32> to vector<16x32xf32>
    %110 = arith.addf %108, %109 : vector<16x32xf32>
    %cst_38 = arith.constant dense<0.000000e+00> : vector<16xf32>
    %111 = vector.multi_reduction <add>, %110, %cst_38 [1] : vector<16x32xf32> to vector<16xf32>
    %112 = vector.shape_cast %111 : vector<16xf32> to vector<16x1xf32>
    %cst_39 = arith.constant 3.200000e+01 : f32
    %113 = vector.broadcast %cst_39 : f32 to vector<16x1xf32>
    %114 = arith.divf %112, %113 : vector<16x1xf32>
    %115 = vector.broadcast %114 : vector<16x1xf32> to vector<16x32xf32>
    %116 = arith.subf %110, %115 : vector<16x32xf32>
    %117 = arith.mulf %116, %116 : vector<16x32xf32>
    %cst_40 = arith.constant dense<0.000000e+00> : vector<16xf32>
    %118 = vector.multi_reduction <add>, %117, %cst_40 [1] : vector<16x32xf32> to vector<16xf32>
    %119 = vector.shape_cast %118 : vector<16xf32> to vector<16x1xf32>
    %cst_41 = arith.constant 3.200000e+01 : f32
    %120 = vector.broadcast %cst_41 : f32 to vector<16x1xf32>
    %121 = arith.divf %119, %120 : vector<16x1xf32>
    %122 = vector.broadcast %114 : vector<16x1xf32> to vector<16x32xf32>
    %123 = arith.subf %110, %122 : vector<16x32xf32>
    %cst_42 = arith.constant 9.99999996E-13 : f32
    %124 = vector.broadcast %cst_42 : f32 to vector<16x1xf32>
    %125 = arith.addf %121, %124 : vector<16x1xf32>
    %126 = math.rsqrt %125 : vector<16x1xf32>
    %127 = vector.broadcast %126 : vector<16x1xf32> to vector<16x32xf32>
    %128 = arith.mulf %123, %127 : vector<16x32xf32>
    %129 = vector.broadcast %31 : vector<1x32xf32> to vector<16x32xf32>
    %130 = arith.mulf %128, %129 : vector<16x32xf32>
    %131 = vector.broadcast %32 : vector<1x32xf32> to vector<16x32xf32>
    %132 = arith.addf %130, %131 : vector<16x32xf32>
    %133 = arith.truncf %132 : vector<16x32xf32> to vector<16x32xbf16>
    %c0_43 = arith.constant 0 : index
    %c0_44 = arith.constant 0 : index
    %c0_45 = arith.constant 0 : index
    %134 = vector.load %arg5[%c0_43, %c0_44, %c0_45] : memref<2x32x64xbf16, #tpu.memory_space<vmem>>, vector<1x32x64xbf16>
    %135 = vector.shape_cast %134 : vector<1x32x64xbf16> to vector<32x64xbf16>
    %cst_46 = arith.constant dense<0.000000e+00> : vector<16x64xf32>
    %136 = tpu.matmul %133, %135, %cst_46 {dimension_numbers = #tpu.dot_dimension_numbers<[1], [0], [0], [1], [0, 0, 1, 1], [], []>} : vector<16x32xbf16>, vector<32x64xbf16>, vector<16x64xf32> -> vector<16x64xf32>
    %137 = vector.broadcast %33 : vector<1x64xf32> to vector<16x64xf32>
    %138 = arith.addf %136, %137 : vector<16x64xf32>
    %139 = arith.mulf %138, %138 : vector<16x64xf32>
    %140 = arith.mulf %138, %139 : vector<16x64xf32>
    %cst_47 = arith.constant 4.471500e-02 : f32
    %141 = vector.broadcast %cst_47 : f32 to vector<16x64xf32>
    %142 = arith.mulf %141, %140 : vector<16x64xf32>
    %143 = arith.addf %138, %142 : vector<16x64xf32>
    %cst_48 = arith.constant 0.797884583 : f32
    %144 = vector.broadcast %cst_48 : f32 to vector<16x64xf32>
    %145 = arith.mulf %144, %143 : vector<16x64xf32>
    %146 = math.tanh %145 : vector<16x64xf32>
    %cst_49 = arith.constant 1.000000e+00 : f32
    %147 = vector.broadcast %cst_49 : f32 to vector<16x64xf32>
    %148 = arith.addf %147, %146 : vector<16x64xf32>
    %cst_50 = arith.constant 5.000000e-01 : f32
    %149 = vector.broadcast %cst_50 : f32 to vector<16x64xf32>
    %150 = arith.mulf %149, %148 : vector<16x64xf32>
    %151 = arith.mulf %138, %150 : vector<16x64xf32>
    %152 = arith.truncf %151 : vector<16x64xf32> to vector<16x64xbf16>
    %c0_51 = arith.constant 0 : index
    %c0_52 = arith.constant 0 : index
    %c0_53 = arith.constant 0 : index
    %153 = vector.load %arg6[%c0_51, %c0_52, %c0_53] : memref<2x64x32xbf16, #tpu.memory_space<vmem>>, vector<1x64x32xbf16>
    %154 = vector.shape_cast %153 : vector<1x64x32xbf16> to vector<64x32xbf16>
    %cst_54 = arith.constant dense<0.000000e+00> : vector<16x32xf32>
    %155 = tpu.matmul %152, %154, %cst_54 {dimension_numbers = #tpu.dot_dimension_numbers<[1], [0], [0], [1], [0, 0, 1, 1], [], []>} : vector<16x64xbf16>, vector<64x32xbf16>, vector<16x32xf32> -> vector<16x32xf32>
    %156 = vector.broadcast %34 : vector<1x32xf32> to vector<16x32xf32>
    %157 = arith.addf %155, %156 : vector<16x32xf32>
    %158 = arith.addf %132, %157 : vector<16x32xf32>
    %cst_55 = arith.constant dense<0.000000e+00> : vector<16xf32>
    %159 = vector.multi_reduction <add>, %158, %cst_55 [1] : vector<16x32xf32> to vector<16xf32>
    %160 = vector.shape_cast %159 : vector<16xf32> to vector<16x1xf32>
    %cst_56 = arith.constant 3.200000e+01 : f32
    %161 = vector.broadcast %cst_56 : f32 to vector<16x1xf32>
    %162 = arith.divf %160, %161 : vector<16x1xf32>
    %163 = vector.broadcast %162 : vector<16x1xf32> to vector<16x32xf32>
    %164 = arith.subf %158, %163 : vector<16x32xf32>
    %165 = arith.mulf %164, %164 : vector<16x32xf32>
    %cst_57 = arith.constant dense<0.000000e+00> : vector<16xf32>
    %166 = vector.multi_reduction <add>, %165, %cst_57 [1] : vector<16x32xf32> to vector<16xf32>
    %167 = vector.shape_cast %166 : vector<16xf32> to vector<16x1xf32>
    %cst_58 = arith.constant 3.200000e+01 : f32
    %168 = vector.broadcast %cst_58 : f32 to vector<16x1xf32>
    %169 = arith.divf %167, %168 : vector<16x1xf32>
    %170 = vector.broadcast %162 : vector<16x1xf32> to vector<16x32xf32>
    %171 = arith.subf %158, %170 : vector<16x32xf32>
    %cst_59 = arith.constant 9.99999996E-13 : f32
    %172 = vector.broadcast %cst_59 : f32 to vector<16x1xf32>
    %173 = arith.addf %169, %172 : vector<16x1xf32>
    %174 = math.rsqrt %173 : vector<16x1xf32>
    %175 = vector.broadcast %174 : vector<16x1xf32> to vector<16x32xf32>
    %176 = arith.mulf %171, %175 : vector<16x32xf32>
    %177 = vector.broadcast %35 : vector<1x32xf32> to vector<16x32xf32>
    %178 = arith.mulf %176, %177 : vector<16x32xf32>
    %179 = vector.broadcast %36 : vector<1x32xf32> to vector<16x32xf32>
    %180 = arith.addf %178, %179 : vector<16x32xf32>
    %c1_60 = arith.constant 1 : index
    %c0_61 = arith.constant 0 : index
    %c0_62 = arith.constant 0 : index
    %181 = vector.load %arg7[%c1_60, %c0_61, %c0_62] : memref<2x8x128xf32, #tpu.memory_space<vmem>>, vector<1x8x128xf32>
    %182 = vector.shape_cast %181 : vector<1x8x128xf32> to vector<8x128xf32>
    %183 = vector.extract_strided_slice %182 {offsets = [0, 0], sizes = [1, 96], strides = [1, 1]} : vector<8x128xf32> to vector<1x96xf32>
    %184 = vector.extract_strided_slice %182 {offsets = [1, 0], sizes = [1, 32], strides = [1, 1]} : vector<8x128xf32> to vector<1x32xf32>
    %185 = vector.extract_strided_slice %182 {offsets = [2, 0], sizes = [1, 32], strides = [1, 1]} : vector<8x128xf32> to vector<1x32xf32>
    %186 = vector.extract_strided_slice %182 {offsets = [3, 0], sizes = [1, 32], strides = [1, 1]} : vector<8x128xf32> to vector<1x32xf32>
    %187 = vector.extract_strided_slice %182 {offsets = [4, 0], sizes = [1, 64], strides = [1, 1]} : vector<8x128xf32> to vector<1x64xf32>
    %188 = vector.extract_strided_slice %182 {offsets = [5, 0], sizes = [1, 32], strides = [1, 1]} : vector<8x128xf32> to vector<1x32xf32>
    %189 = vector.extract_strided_slice %182 {offsets = [6, 0], sizes = [1, 32], strides = [1, 1]} : vector<8x128xf32> to vector<1x32xf32>
    %190 = vector.extract_strided_slice %182 {offsets = [7, 0], sizes = [1, 32], strides = [1, 1]} : vector<8x128xf32> to vector<1x32xf32>
    %191 = arith.truncf %180 : vector<16x32xf32> to vector<16x32xbf16>
    %c1_63 = arith.constant 1 : index
    %c0_64 = arith.constant 0 : index
    %c0_65 = arith.constant 0 : index
    %192 = vector.load %arg3[%c1_63, %c0_64, %c0_65] : memref<2x32x96xbf16, #tpu.memory_space<vmem>>, vector<1x32x96xbf16>
    %193 = vector.shape_cast %192 : vector<1x32x96xbf16> to vector<32x96xbf16>
    %cst_66 = arith.constant dense<0.000000e+00> : vector<16x96xf32>
    %194 = tpu.matmul %191, %193, %cst_66 {dimension_numbers = #tpu.dot_dimension_numbers<[1], [0], [0], [1], [0, 0, 1, 1], [], []>} : vector<16x32xbf16>, vector<32x96xbf16>, vector<16x96xf32> -> vector<16x96xf32>
    %195 = vector.broadcast %183 : vector<1x96xf32> to vector<16x96xf32>
    %196 = arith.addf %194, %195 : vector<16x96xf32>
    %cst_67 = arith.constant 0.000000e+00 : f32
    %197 = vector.broadcast %cst_67 : f32 to vector<16x32xf32>
    %198 = vector.extract_strided_slice %196 {offsets = [0, 0], sizes = [16, 16], strides = [1, 1]} : vector<16x96xf32> to vector<16x16xf32>
    %199 = vector.shape_cast %198 : vector<16x16xf32> to vector<2x8x16xf32>
    %200 = vector.extract_strided_slice %196 {offsets = [0, 32], sizes = [16, 16], strides = [1, 1]} : vector<16x96xf32> to vector<16x16xf32>
    %201 = vector.shape_cast %200 : vector<16x16xf32> to vector<2x8x16xf32>
    %202 = vector.extract_strided_slice %196 {offsets = [0, 64], sizes = [16, 16], strides = [1, 1]} : vector<16x96xf32> to vector<16x16xf32>
    %203 = vector.shape_cast %202 : vector<16x16xf32> to vector<2x8x16xf32>
    %204 = arith.truncf %199 : vector<2x8x16xf32> to vector<2x8x16xbf16>
    %205 = arith.truncf %201 : vector<2x8x16xf32> to vector<2x8x16xbf16>
    "tpu.trace_start"() <{level = 10 : i32, message = "bqd,bkd->bqk"}> : () -> ()
    %cst_68 = arith.constant dense<0.000000e+00> : vector<2x8x8xf32>
    %206 = tpu.matmul %204, %205, %cst_68 {dimension_numbers = #tpu.dot_dimension_numbers<[2], [2], [1], [1], [0, 0, 0, 1, 1, 1], [0], [0]>} : vector<2x8x16xbf16>, vector<2x8x16xbf16>, vector<2x8x8xf32> -> vector<2x8x8xf32>
    "tpu.trace_stop"() : () -> ()
    %cst_69 = arith.constant 2.500000e-01 : f32
    %207 = vector.broadcast %cst_69 : f32 to vector<2x8x8xf32>
    %208 = arith.mulf %206, %207 : vector<2x8x8xf32>
    %209 = vector.broadcast %26 : vector<2x1x8xf32> to vector<2x8x8xf32>
    %210 = arith.addf %208, %209 : vector<2x8x8xf32>
    %cst_70 = arith.constant dense<0xFF800000> : vector<2x8xf32>
    %211 = vector.multi_reduction <maximumf>, %210, %cst_70 [2] : vector<2x8x8xf32> to vector<2x8xf32>
    %212 = vector.shape_cast %211 : vector<2x8xf32> to vector<2x8x1xf32>
    %213 = vector.broadcast %212 : vector<2x8x1xf32> to vector<2x8x8xf32>
    %214 = arith.subf %210, %213 : vector<2x8x8xf32>
    %215 = math.exp %214 : vector<2x8x8xf32>
    %cst_71 = arith.constant dense<0.000000e+00> : vector<2x8xf32>
    %216 = vector.multi_reduction <add>, %215, %cst_71 [2] : vector<2x8x8xf32> to vector<2x8xf32>
    %217 = vector.shape_cast %216 : vector<2x8xf32> to vector<2x8x1xf32>
    %218 = tpu.reciprocal %217 {approx = true} : vector<2x8x1xf32> -> vector<2x8x1xf32>
    %219 = vector.broadcast %218 : vector<2x8x1xf32> to vector<2x8x8xf32>
    %220 = arith.mulf %215, %219 : vector<2x8x8xf32>
    %221 = arith.truncf %220 : vector<2x8x8xf32> to vector<2x8x8xbf16>
    %222 = arith.truncf %203 : vector<2x8x16xf32> to vector<2x8x16xbf16>
    "tpu.trace_start"() <{level = 10 : i32, message = "bqk,bkd->bqd"}> : () -> ()
    %cst_72 = arith.constant dense<0.000000e+00> : vector<2x8x16xf32>
    %223 = tpu.matmul %221, %222, %cst_72 {dimension_numbers = #tpu.dot_dimension_numbers<[2], [1], [1], [2], [0, 0, 0, 1, 1, 2], [0], [0]>} : vector<2x8x8xbf16>, vector<2x8x16xbf16>, vector<2x8x16xf32> -> vector<2x8x16xf32>
    "tpu.trace_stop"() : () -> ()
    %224 = vector.shape_cast %223 : vector<2x8x16xf32> to vector<16x16xf32>
    %225 = arith.truncf %224 : vector<16x16xf32> to vector<16x16xbf16>
    %c1_73 = arith.constant 1 : index
    %c0_74 = arith.constant 0 : index
    %c0_75 = arith.constant 0 : index
    %c0_76 = arith.constant 0 : index
    %226 = vector.load %arg4[%c1_73, %c0_74, %c0_75, %c0_76] : memref<2x2x16x32xbf16, #tpu.memory_space<vmem>>, vector<1x1x16x32xbf16>
    %227 = vector.shape_cast %226 : vector<1x1x16x32xbf16> to vector<16x32xbf16>
    %cst_77 = arith.constant dense<0.000000e+00> : vector<16x32xf32>
    %228 = tpu.matmul %225, %227, %cst_77 {dimension_numbers = #tpu.dot_dimension_numbers<[1], [0], [0], [1], [0, 0, 1, 1], [], []>} : vector<16x16xbf16>, vector<16x32xbf16>, vector<16x32xf32> -> vector<16x32xf32>
    %229 = arith.addf %197, %228 : vector<16x32xf32>
    %230 = vector.extract_strided_slice %196 {offsets = [0, 16], sizes = [16, 16], strides = [1, 1]} : vector<16x96xf32> to vector<16x16xf32>
    %231 = vector.shape_cast %230 : vector<16x16xf32> to vector<2x8x16xf32>
    %232 = vector.extract_strided_slice %196 {offsets = [0, 48], sizes = [16, 16], strides = [1, 1]} : vector<16x96xf32> to vector<16x16xf32>
    %233 = vector.shape_cast %232 : vector<16x16xf32> to vector<2x8x16xf32>
    %234 = vector.extract_strided_slice %196 {offsets = [0, 80], sizes = [16, 16], strides = [1, 1]} : vector<16x96xf32> to vector<16x16xf32>
    %235 = vector.shape_cast %234 : vector<16x16xf32> to vector<2x8x16xf32>
    %236 = arith.truncf %231 : vector<2x8x16xf32> to vector<2x8x16xbf16>
    %237 = arith.truncf %233 : vector<2x8x16xf32> to vector<2x8x16xbf16>
    "tpu.trace_start"() <{level = 10 : i32, message = "bqd,bkd->bqk"}> : () -> ()
    %cst_78 = arith.constant dense<0.000000e+00> : vector<2x8x8xf32>
    %238 = tpu.matmul %236, %237, %cst_78 {dimension_numbers = #tpu.dot_dimension_numbers<[2], [2], [1], [1], [0, 0, 0, 1, 1, 1], [0], [0]>} : vector<2x8x16xbf16>, vector<2x8x16xbf16>, vector<2x8x8xf32> -> vector<2x8x8xf32>
    "tpu.trace_stop"() : () -> ()
    %cst_79 = arith.constant 2.500000e-01 : f32
    %239 = vector.broadcast %cst_79 : f32 to vector<2x8x8xf32>
    %240 = arith.mulf %238, %239 : vector<2x8x8xf32>
    %241 = vector.broadcast %26 : vector<2x1x8xf32> to vector<2x8x8xf32>
    %242 = arith.addf %240, %241 : vector<2x8x8xf32>
    %cst_80 = arith.constant dense<0xFF800000> : vector<2x8xf32>
    %243 = vector.multi_reduction <maximumf>, %242, %cst_80 [2] : vector<2x8x8xf32> to vector<2x8xf32>
    %244 = vector.shape_cast %243 : vector<2x8xf32> to vector<2x8x1xf32>
    %245 = vector.broadcast %244 : vector<2x8x1xf32> to vector<2x8x8xf32>
    %246 = arith.subf %242, %245 : vector<2x8x8xf32>
    %247 = math.exp %246 : vector<2x8x8xf32>
    %cst_81 = arith.constant dense<0.000000e+00> : vector<2x8xf32>
    %248 = vector.multi_reduction <add>, %247, %cst_81 [2] : vector<2x8x8xf32> to vector<2x8xf32>
    %249 = vector.shape_cast %248 : vector<2x8xf32> to vector<2x8x1xf32>
    %250 = tpu.reciprocal %249 {approx = true} : vector<2x8x1xf32> -> vector<2x8x1xf32>
    %251 = vector.broadcast %250 : vector<2x8x1xf32> to vector<2x8x8xf32>
    %252 = arith.mulf %247, %251 : vector<2x8x8xf32>
    %253 = arith.truncf %252 : vector<2x8x8xf32> to vector<2x8x8xbf16>
    %254 = arith.truncf %235 : vector<2x8x16xf32> to vector<2x8x16xbf16>
    "tpu.trace_start"() <{level = 10 : i32, message = "bqk,bkd->bqd"}> : () -> ()
    %cst_82 = arith.constant dense<0.000000e+00> : vector<2x8x16xf32>
    %255 = tpu.matmul %253, %254, %cst_82 {dimension_numbers = #tpu.dot_dimension_numbers<[2], [1], [1], [2], [0, 0, 0, 1, 1, 2], [0], [0]>} : vector<2x8x8xbf16>, vector<2x8x16xbf16>, vector<2x8x16xf32> -> vector<2x8x16xf32>
    "tpu.trace_stop"() : () -> ()
    %256 = vector.shape_cast %255 : vector<2x8x16xf32> to vector<16x16xf32>
    %257 = arith.truncf %256 : vector<16x16xf32> to vector<16x16xbf16>
    %c1_83 = arith.constant 1 : index
    %c1_84 = arith.constant 1 : index
    %c0_85 = arith.constant 0 : index
    %c0_86 = arith.constant 0 : index
    %258 = vector.load %arg4[%c1_83, %c1_84, %c0_85, %c0_86] : memref<2x2x16x32xbf16, #tpu.memory_space<vmem>>, vector<1x1x16x32xbf16>
    %259 = vector.shape_cast %258 : vector<1x1x16x32xbf16> to vector<16x32xbf16>
    %cst_87 = arith.constant dense<0.000000e+00> : vector<16x32xf32>
    %260 = tpu.matmul %257, %259, %cst_87 {dimension_numbers = #tpu.dot_dimension_numbers<[1], [0], [0], [1], [0, 0, 1, 1], [], []>} : vector<16x16xbf16>, vector<16x32xbf16>, vector<16x32xf32> -> vector<16x32xf32>
    %261 = arith.addf %229, %260 : vector<16x32xf32>
    %262 = arith.addf %180, %261 : vector<16x32xf32>
    %263 = vector.broadcast %184 : vector<1x32xf32> to vector<16x32xf32>
    %264 = arith.addf %262, %263 : vector<16x32xf32>
    %cst_88 = arith.constant dense<0.000000e+00> : vector<16xf32>
    %265 = vector.multi_reduction <add>, %264, %cst_88 [1] : vector<16x32xf32> to vector<16xf32>
    %266 = vector.shape_cast %265 : vector<16xf32> to vector<16x1xf32>
    %cst_89 = arith.constant 3.200000e+01 : f32
    %267 = vector.broadcast %cst_89 : f32 to vector<16x1xf32>
    %268 = arith.divf %266, %267 : vector<16x1xf32>
    %269 = vector.broadcast %268 : vector<16x1xf32> to vector<16x32xf32>
    %270 = arith.subf %264, %269 : vector<16x32xf32>
    %271 = arith.mulf %270, %270 : vector<16x32xf32>
    %cst_90 = arith.constant dense<0.000000e+00> : vector<16xf32>
    %272 = vector.multi_reduction <add>, %271, %cst_90 [1] : vector<16x32xf32> to vector<16xf32>
    %273 = vector.shape_cast %272 : vector<16xf32> to vector<16x1xf32>
    %cst_91 = arith.constant 3.200000e+01 : f32
    %274 = vector.broadcast %cst_91 : f32 to vector<16x1xf32>
    %275 = arith.divf %273, %274 : vector<16x1xf32>
    %276 = vector.broadcast %268 : vector<16x1xf32> to vector<16x32xf32>
    %277 = arith.subf %264, %276 : vector<16x32xf32>
    %cst_92 = arith.constant 9.99999996E-13 : f32
    %278 = vector.broadcast %cst_92 : f32 to vector<16x1xf32>
    %279 = arith.addf %275, %278 : vector<16x1xf32>
    %280 = math.rsqrt %279 : vector<16x1xf32>
    %281 = vector.broadcast %280 : vector<16x1xf32> to vector<16x32xf32>
    %282 = arith.mulf %277, %281 : vector<16x32xf32>
    %283 = vector.broadcast %185 : vector<1x32xf32> to vector<16x32xf32>
    %284 = arith.mulf %282, %283 : vector<16x32xf32>
    %285 = vector.broadcast %186 : vector<1x32xf32> to vector<16x32xf32>
    %286 = arith.addf %284, %285 : vector<16x32xf32>
    %287 = arith.truncf %286 : vector<16x32xf32> to vector<16x32xbf16>
    %c1_93 = arith.constant 1 : index
    %c0_94 = arith.constant 0 : index
    %c0_95 = arith.constant 0 : index
    %288 = vector.load %arg5[%c1_93, %c0_94, %c0_95] : memref<2x32x64xbf16, #tpu.memory_space<vmem>>, vector<1x32x64xbf16>
    %289 = vector.shape_cast %288 : vector<1x32x64xbf16> to vector<32x64xbf16>
    %cst_96 = arith.constant dense<0.000000e+00> : vector<16x64xf32>
    %290 = tpu.matmul %287, %289, %cst_96 {dimension_numbers = #tpu.dot_dimension_numbers<[1], [0], [0], [1], [0, 0, 1, 1], [], []>} : vector<16x32xbf16>, vector<32x64xbf16>, vector<16x64xf32> -> vector<16x64xf32>
    %291 = vector.broadcast %187 : vector<1x64xf32> to vector<16x64xf32>
    %292 = arith.addf %290, %291 : vector<16x64xf32>
    %293 = arith.mulf %292, %292 : vector<16x64xf32>
    %294 = arith.mulf %292, %293 : vector<16x64xf32>
    %cst_97 = arith.constant 4.471500e-02 : f32
    %295 = vector.broadcast %cst_97 : f32 to vector<16x64xf32>
    %296 = arith.mulf %295, %294 : vector<16x64xf32>
    %297 = arith.addf %292, %296 : vector<16x64xf32>
    %cst_98 = arith.constant 0.797884583 : f32
    %298 = vector.broadcast %cst_98 : f32 to vector<16x64xf32>
    %299 = arith.mulf %298, %297 : vector<16x64xf32>
    %300 = math.tanh %299 : vector<16x64xf32>
    %cst_99 = arith.constant 1.000000e+00 : f32
    %301 = vector.broadcast %cst_99 : f32 to vector<16x64xf32>
    %302 = arith.addf %301, %300 : vector<16x64xf32>
    %cst_100 = arith.constant 5.000000e-01 : f32
    %303 = vector.broadcast %cst_100 : f32 to vector<16x64xf32>
    %304 = arith.mulf %303, %302 : vector<16x64xf32>
    %305 = arith.mulf %292, %304 : vector<16x64xf32>
    %306 = arith.truncf %305 : vector<16x64xf32> to vector<16x64xbf16>
    %c1_101 = arith.constant 1 : index
    %c0_102 = arith.constant 0 : index
    %c0_103 = arith.constant 0 : index
    %307 = vector.load %arg6[%c1_101, %c0_102, %c0_103] : memref<2x64x32xbf16, #tpu.memory_space<vmem>>, vector<1x64x32xbf16>
    %308 = vector.shape_cast %307 : vector<1x64x32xbf16> to vector<64x32xbf16>
    %cst_104 = arith.constant dense<0.000000e+00> : vector<16x32xf32>
    %309 = tpu.matmul %306, %308, %cst_104 {dimension_numbers = #tpu.dot_dimension_numbers<[1], [0], [0], [1], [0, 0, 1, 1], [], []>} : vector<16x64xbf16>, vector<64x32xbf16>, vector<16x32xf32> -> vector<16x32xf32>
    %310 = vector.broadcast %188 : vector<1x32xf32> to vector<16x32xf32>
    %311 = arith.addf %309, %310 : vector<16x32xf32>
    %312 = arith.addf %286, %311 : vector<16x32xf32>
    %cst_105 = arith.constant dense<0.000000e+00> : vector<16xf32>
    %313 = vector.multi_reduction <add>, %312, %cst_105 [1] : vector<16x32xf32> to vector<16xf32>
    %314 = vector.shape_cast %313 : vector<16xf32> to vector<16x1xf32>
    %cst_106 = arith.constant 3.200000e+01 : f32
    %315 = vector.broadcast %cst_106 : f32 to vector<16x1xf32>
    %316 = arith.divf %314, %315 : vector<16x1xf32>
    %317 = vector.broadcast %316 : vector<16x1xf32> to vector<16x32xf32>
    %318 = arith.subf %312, %317 : vector<16x32xf32>
    %319 = arith.mulf %318, %318 : vector<16x32xf32>
    %cst_107 = arith.constant dense<0.000000e+00> : vector<16xf32>
    %320 = vector.multi_reduction <add>, %319, %cst_107 [1] : vector<16x32xf32> to vector<16xf32>
    %321 = vector.shape_cast %320 : vector<16xf32> to vector<16x1xf32>
    %cst_108 = arith.constant 3.200000e+01 : f32
    %322 = vector.broadcast %cst_108 : f32 to vector<16x1xf32>
    %323 = arith.divf %321, %322 : vector<16x1xf32>
    %324 = vector.broadcast %316 : vector<16x1xf32> to vector<16x32xf32>
    %325 = arith.subf %312, %324 : vector<16x32xf32>
    %cst_109 = arith.constant 9.99999996E-13 : f32
    %326 = vector.broadcast %cst_109 : f32 to vector<16x1xf32>
    %327 = arith.addf %323, %326 : vector<16x1xf32>
    %328 = math.rsqrt %327 : vector<16x1xf32>
    %329 = vector.broadcast %328 : vector<16x1xf32> to vector<16x32xf32>
    %330 = arith.mulf %325, %329 : vector<16x32xf32>
    %331 = vector.broadcast %189 : vector<1x32xf32> to vector<16x32xf32>
    %332 = arith.mulf %330, %331 : vector<16x32xf32>
    %333 = vector.broadcast %190 : vector<1x32xf32> to vector<16x32xf32>
    %334 = arith.addf %332, %333 : vector<16x32xf32>
    %335 = arith.truncf %334 : vector<16x32xf32> to vector<16x32xbf16>
    %c0_110 = arith.constant 0 : index
    %c0_111 = arith.constant 0 : index
    %336 = vector.load %arg8[%c0_110, %c0_111] : memref<32x512xbf16, #tpu.memory_space<vmem>>, vector<32x512xbf16>
    %cst_112 = arith.constant dense<0.000000e+00> : vector<16x512xf32>
    %337 = tpu.matmul %335, %336, %cst_112 {dimension_numbers = #tpu.dot_dimension_numbers<[1], [0], [0], [1], [0, 0, 1, 1], [], []>} : vector<16x32xbf16>, vector<32x512xbf16>, vector<16x512xf32> -> vector<16x512xf32>
    %c0_113 = arith.constant 0 : index
    %c0_114 = arith.constant 0 : index
    %338 = vector.load %arg12[%c0_113, %c0_114] : memref<4x512xf32, #tpu.memory_space<vmem>>, vector<1x512xf32>
    %339 = vector.broadcast %338 : vector<1x512xf32> to vector<16x512xf32>
    %340 = arith.addf %337, %339 : vector<16x512xf32>
    %cst_115 = arith.constant 0.000000e+00 : f32
    %341 = vector.broadcast %cst_115 : f32 to vector<16x512xf32>
    %342 = arith.maximumf %340, %341 : vector<16x512xf32>
    %343 = arith.truncf %342 : vector<16x512xf32> to vector<16x512xbf16>
    %c0_116 = arith.constant 0 : index
    %c0_117 = arith.constant 0 : index
    %344 = vector.load %arg9[%c0_116, %c0_117] : memref<512x256xbf16, #tpu.memory_space<vmem>>, vector<512x256xbf16>
    %cst_118 = arith.constant dense<0.000000e+00> : vector<16x256xf32>
    %345 = tpu.matmul %343, %344, %cst_118 {dimension_numbers = #tpu.dot_dimension_numbers<[1], [0], [0], [1], [0, 0, 1, 1], [], []>} : vector<16x512xbf16>, vector<512x256xbf16>, vector<16x256xf32> -> vector<16x256xf32>
    %c1_119 = arith.constant 1 : index
    %c0_120 = arith.constant 0 : index
    %346 = vector.load %arg12[%c1_119, %c0_120] : memref<4x512xf32, #tpu.memory_space<vmem>>, vector<1x256xf32>
    %347 = vector.broadcast %346 : vector<1x256xf32> to vector<16x256xf32>
    %348 = arith.addf %345, %347 : vector<16x256xf32>
    %cst_121 = arith.constant 0.000000e+00 : f32
    %349 = vector.broadcast %cst_121 : f32 to vector<16x256xf32>
    %350 = arith.maximumf %348, %349 : vector<16x256xf32>
    %351 = arith.truncf %350 : vector<16x256xf32> to vector<16x256xbf16>
    %c0_122 = arith.constant 0 : index
    %c0_123 = arith.constant 0 : index
    %352 = vector.load %arg10[%c0_122, %c0_123] : memref<256x128xbf16, #tpu.memory_space<vmem>>, vector<256x128xbf16>
    %cst_124 = arith.constant dense<0.000000e+00> : vector<16x128xf32>
    %353 = tpu.matmul %351, %352, %cst_124 {dimension_numbers = #tpu.dot_dimension_numbers<[1], [0], [0], [1], [0, 0, 1, 1], [], []>} : vector<16x256xbf16>, vector<256x128xbf16>, vector<16x128xf32> -> vector<16x128xf32>
    %c2 = arith.constant 2 : index
    %c0_125 = arith.constant 0 : index
    %354 = vector.load %arg12[%c2, %c0_125] : memref<4x512xf32, #tpu.memory_space<vmem>>, vector<1x128xf32>
    %355 = vector.broadcast %354 : vector<1x128xf32> to vector<16x128xf32>
    %356 = arith.addf %353, %355 : vector<16x128xf32>
    %cst_126 = arith.constant 0.000000e+00 : f32
    %357 = vector.broadcast %cst_126 : f32 to vector<16x128xf32>
    %358 = arith.maximumf %356, %357 : vector<16x128xf32>
    %359 = arith.truncf %358 : vector<16x128xf32> to vector<16x128xbf16>
    %c0_127 = arith.constant 0 : index
    %c0_128 = arith.constant 0 : index
    %360 = vector.load %arg11[%c0_127, %c0_128] : memref<128x128xbf16, #tpu.memory_space<vmem>>, vector<128x128xbf16>
    %cst_129 = arith.constant dense<0.000000e+00> : vector<16x128xf32>
    %361 = tpu.matmul %359, %360, %cst_129 {dimension_numbers = #tpu.dot_dimension_numbers<[1], [0], [0], [1], [0, 0, 1, 1], [], []>} : vector<16x128xbf16>, vector<128x128xbf16>, vector<16x128xf32> -> vector<16x128xf32>
    %c3 = arith.constant 3 : index
    %c0_130 = arith.constant 0 : index
    %362 = vector.load %arg12[%c3, %c0_130] : memref<4x512xf32, #tpu.memory_space<vmem>>, vector<1x128xf32>
    %363 = vector.broadcast %362 : vector<1x128xf32> to vector<16x128xf32>
    %364 = arith.addf %361, %363 : vector<16x128xf32>
    %c0_131 = arith.constant 0 : index
    %c0_132 = arith.constant 0 : index
    %365 = vector.load %arg13[%c0_131, %c0_132] : memref<16x128xf32, #tpu.memory_space<vmem>>, vector<16x128xf32>
    tpu.vector_store %arg13[%c0_131, %c0_132], %364 {strides = array<i32>} : memref<16x128xf32, #tpu.memory_space<vmem>>, vector<16x128xf32>,
    return
  }
}

</mosaic_0001>

<llo_original>
// kernel: electra_for_custom_classification.1
$region0: #{electra_for_custom_classification.1}
  #allocation0 [shape = 'u32[]', space=smem, size = 0x4, offset = 0x4, fixed_abs, tag = 'smem constant byte address 0x4 - core index']
  #allocation1 [shape = 'u32[72,128]{1,0:T(1,128)}', space=vmem, size = 0x9000, scoped, tag = 'internal scratch']
  %s0 = inlined_call_operand.vmem [shape: f32[16,32], index: 0, kind: input, shape index: {}]
  %s1 = inlined_call_operand.vmem [shape: f32[2,32], index: 1, kind: input, shape index: {}]
  %s2 = inlined_call_operand.vmem [shape: f32[2,8], index: 2, kind: input, shape index: {}]
  %s3 = inlined_call_operand.hbm [shape: bf16[2,32,96], index: 3, kind: input, shape index: {}]
  %s4 = inlined_call_operand.hbm [shape: bf16[2,2,16,32], index: 4, kind: input, shape index: {}]
  %s5 = inlined_call_operand.hbm [shape: bf16[2,32,64], index: 5, kind: input, shape index: {}]
  %s6 = inlined_call_operand.vmem [shape: bf16[2,64,32], index: 6, kind: input, shape index: {}]
  %s7 = inlined_call_operand.vmem [shape: f32[2,8,128], index: 7, kind: input, shape index: {}]
  %s8 = inlined_call_operand.hbm [shape: bf16[32,512], index: 8, kind: input, shape index: {}]
  %s9 = inlined_call_operand.vmem [shape: bf16[512,256], index: 9, kind: input, shape index: {}]
  %s10 = inlined_call_operand.vmem [shape: bf16[256,128], index: 10, kind: input, shape index: {}]
  %s11 = inlined_call_operand.hbm [shape: bf16[128,128], index: 11, kind: input, shape index: {}]
  %s12 = inlined_call_operand.hbm [shape: f32[4,512], index: 12, kind: input, shape index: {}]
  %s13 = inlined_call_operand.vmem [shape: f32[16,128], index: 13, kind: output, shape index: {}]
  %s14 = sld [smem:[#allocation0]]
  $region86: #{electra_for_custom_classification.1} parent=0
    _
  %s16 = ssub.s32 1, %s14
  %s17 = scalar_select 0, %s16, %s14
  $region1: #{electra_for_custom_classification.1} parent=0
    #allocation2 [shape = 'u8[16384]{0}', space=vmem, size = 0x4000, scoped, tag = 'input window, operand 3, single buffered']
    #allocation3 [shape = 's32[1]{0}', space=sflag, size = 0x4, scoped, tag = 'scoped memory for electra_for_custom_classification.1']
    #allocation4 [shape = 'u8[16384]{0}', space=vmem, size = 0x4000, scoped, tag = 'input window, operand 4, single buffered']
    #allocation5 [shape = 's32[1]{0}', space=sflag, size = 0x4, scoped, tag = 'scoped memory for electra_for_custom_classification.1']
    #allocation6 [shape = 'u8[16384]{0}', space=vmem, size = 0x4000, scoped, tag = 'input window, operand 5, single buffered']
    #allocation7 [shape = 'u8[32768]{0}', space=vmem, size = 0x8000, scoped, tag = 'input window, operand 8, single buffered']
    #allocation8 [shape = 's32[1]{0}', space=sflag, size = 0x4, scoped, tag = 'scoped memory for electra_for_custom_classification.1']
    #allocation9 [shape = 'u8[32768]{0}', space=vmem, size = 0x8000, scoped, tag = 'input window, operand 11, single buffered']
    #allocation10 [shape = 'u8[8192]{0}', space=vmem, size = 0x2000, scoped, tag = 'input window, operand 12, single buffered']
    #allocation11 [shape = 's32[1]{0}', space=sflag, size = 0x4, scoped, tag = 'scoped memory for electra_for_custom_classification.1']
    %18 = vsyncpa [#allocation3], 0
    %19 = vsyncpa [#allocation5], 0
    %20 = vsyncpa [#allocation8], 0
    %21 = vsyncpa [#allocation11], 0
    // Predicated region
    $region2: #{electra_for_custom_classification.1} parent=1 // pred_check
      _
    $region3: #{electra_for_custom_classification.1} parent=1 // pred_check_branch
      %23 = sbr.rel (0) target = $region5
    $region4: #{electra_for_custom_classification.1} parent=1 // pred_region
      _
    $region5: #{electra_for_custom_classification.1} parent=1 // pred_fallthru
      _
    // Predicated region
    $region6: #{electra_for_custom_classification.1} parent=1 // pred_check
      _
    $region7: #{electra_for_custom_classification.1} parent=1 // pred_check_branch
      %25 = sbr.rel (0) target = $region9
    $region8: #{electra_for_custom_classification.1} parent=1 // pred_region
      _
    $region9: #{electra_for_custom_classification.1} parent=1 // pred_fallthru
      _
    // Predicated region
    $region10: #{electra_for_custom_classification.1} parent=1 // pred_check
      _
    $region11: #{electra_for_custom_classification.1} parent=1 // pred_check_branch
      %27 = sbr.rel (0) target = $region13
    $region12: #{electra_for_custom_classification.1} parent=1 // pred_region
      _
    $region13: #{electra_for_custom_classification.1} parent=1 // pred_fallthru
      _
    // Predicated region
    $region14: #{electra_for_custom_classification.1} parent=1 // pred_check
      _
    $region15: #{electra_for_custom_classification.1} parent=1 // pred_check_branch
      %29 = sbr.rel (0) target = $region17
    $region16: #{electra_for_custom_classification.1} parent=1 // pred_region
      %31 = vsyncadd [#allocation3], 0
      %s32 = sshll.u32 %s3, 4
      %s33 = int_to_ptr.hbm [resolvable:$true] %s32
      %s34 = sshll.u32 [#allocation2], 4
      %s35 = int_to_ptr.vmem [resolvable:$true] %s34
      %40 = dma.hbm_to_vmem [thread:$0]  %s33, 512, %s35, [#allocation3], 64, 64, 4
    $region17: #{electra_for_custom_classification.1} parent=1 // pred_fallthru
      _
    // Predicated region
    $region18: #{electra_for_custom_classification.1} parent=1 // pred_check
      _
    $region19: #{electra_for_custom_classification.1} parent=1 // pred_check_branch
      %42 = sbr.rel (0) target = $region21
    $region20: #{electra_for_custom_classification.1} parent=1 // pred_region
      %44 = vsyncadd [#allocation5], 0
      %s45 = sshll.u32 %s4, 4
      %s46 = int_to_ptr.hbm [resolvable:$true] %s45
      %s47 = sshll.u32 [#allocation4], 4
      %s48 = int_to_ptr.vmem [resolvable:$true] %s47
      %53 = dma.hbm_to_vmem [thread:$0]  %s46, 512, %s48, [#allocation5], 64, 64, 4
    $region21: #{electra_for_custom_classification.1} parent=1 // pred_fallthru
      _
    // Predicated region
    $region22: #{electra_for_custom_classification.1} parent=1 // pred_check
      _
    $region23: #{electra_for_custom_classification.1} parent=1 // pred_check_branch
      %55 = sbr.rel (0) target = $region25
    $region24: #{electra_for_custom_classification.1} parent=1 // pred_region
      %57 = vsyncadd [#allocation5], 0
      %s58 = sshll.u32 %s5, 4
      %s59 = int_to_ptr.hbm [resolvable:$true] %s58
      %s60 = sshll.u32 [#allocation6], 4
      %s61 = int_to_ptr.vmem [resolvable:$true] %s60
      %66 = dma.hbm_to_vmem [thread:$0]  %s59, 512, %s61, [#allocation5], 64, 64, 4
    $region25: #{electra_for_custom_classification.1} parent=1 // pred_fallthru
      _
    // Predicated region
    $region26: #{electra_for_custom_classification.1} parent=1 // pred_check
      _
    $region27: #{electra_for_custom_classification.1} parent=1 // pred_check_branch
      %68 = sbr.rel (0) target = $region29
    $region28: #{electra_for_custom_classification.1} parent=1 // pred_region
      _
    $region29: #{electra_for_custom_classification.1} parent=1 // pred_fallthru
      _
    // Predicated region
    $region30: #{electra_for_custom_classification.1} parent=1 // pred_check
      _
    $region31: #{electra_for_custom_classification.1} parent=1 // pred_check_branch
      %70 = sbr.rel (0) target = $region33
    $region32: #{electra_for_custom_classification.1} parent=1 // pred_region
      _
    $region33: #{electra_for_custom_classification.1} parent=1 // pred_fallthru
      _
    // Predicated region
    $region34: #{electra_for_custom_classification.1} parent=1 // pred_check
      _
    $region35: #{electra_for_custom_classification.1} parent=1 // pred_check_branch
      %72 = sbr.rel (0) target = $region37
    $region36: #{electra_for_custom_classification.1} parent=1 // pred_region
      %74 = vsyncadd [#allocation8], 0
      %s75 = sshll.u32 %s8, 4
      %s76 = int_to_ptr.hbm [resolvable:$true] %s75
      %s77 = sshll.u32 [#allocation7], 4
      %s78 = int_to_ptr.vmem [resolvable:$true] %s77
      %83 = dma.hbm_to_vmem [thread:$0]  %s76, 1024, %s78, [#allocation8], 256, 256, 16
    $region37: #{electra_for_custom_classification.1} parent=1 // pred_fallthru
      _
    // Predicated region
    $region38: #{electra_for_custom_classification.1} parent=1 // pred_check
      _
    $region39: #{electra_for_custom_classification.1} parent=1 // pred_check_branch
      %85 = sbr.rel (0) target = $region41
    $region40: #{electra_for_custom_classification.1} parent=1 // pred_region
      _
    $region41: #{electra_for_custom_classification.1} parent=1 // pred_fallthru
      _
    // Predicated region
    $region42: #{electra_for_custom_classification.1} parent=1 // pred_check
      _
    $region43: #{electra_for_custom_classification.1} parent=1 // pred_check_branch
      %87 = sbr.rel (0) target = $region45
    $region44: #{electra_for_custom_classification.1} parent=1 // pred_region
      _
    $region45: #{electra_for_custom_classification.1} parent=1 // pred_fallthru
      _
    // Predicated region
    $region46: #{electra_for_custom_classification.1} parent=1 // pred_check
      _
    $region47: #{electra_for_custom_classification.1} parent=1 // pred_check_branch
      %89 = sbr.rel (0) target = $region49
    $region48: #{electra_for_custom_classification.1} parent=1 // pred_region
      %91 = vsyncadd [#allocation8], 0
      %s92 = sshll.u32 %s11, 4
      %s93 = int_to_ptr.hbm [resolvable:$true] %s92
      %s94 = sshll.u32 [#allocation9], 4
      %s95 = int_to_ptr.vmem [resolvable:$true] %s94
      %100 = dma.hbm_to_vmem [thread:$0]  %s93, 1024, %s95, [#allocation8], 64, 64, 4
    $region49: #{electra_for_custom_classification.1} parent=1 // pred_fallthru
      _
    // Predicated region
    $region50: #{electra_for_custom_classification.1} parent=1 // pred_check
      _
    $region51: #{electra_for_custom_classification.1} parent=1 // pred_check_branch
      %102 = sbr.rel (0) target = $region53
    $region52: #{electra_for_custom_classification.1} parent=1 // pred_region
      %104 = vsyncadd [#allocation11], 0
      %s106 = sshll.u32 %s12, 4
      %s107 = int_to_ptr.hbm [resolvable:$true] %s106
      %s108 = sshll.u32 [#allocation10], 4
      %s109 = int_to_ptr.vmem [resolvable:$true] %s108
      %111 = dma.hbm_to_vmem [thread:$0]  %s107, 256, %s109, [#allocation11]
    $region53: #{electra_for_custom_classification.1} parent=1 // pred_fallthru
      _
    // Predicated region
    $region54: #{electra_for_custom_classification.1} parent=1 // pred_check
      _
    $region55: #{electra_for_custom_classification.1} parent=1 // pred_check_branch
      %113 = sbr.rel (0) target = $region57
    $region56: #{electra_for_custom_classification.1} parent=1 // pred_region
      %115 = dma.done [#allocation3], 512
    $region57: #{electra_for_custom_classification.1} parent=1 // pred_fallthru
      _
    // Predicated region
    $region58: #{electra_for_custom_classification.1} parent=1 // pred_check
      _
    $region59: #{electra_for_custom_classification.1} parent=1 // pred_check_branch
      %117 = sbr.rel (0) target = $region61
    $region60: #{electra_for_custom_classification.1} parent=1 // pred_region
      %119 = dma.done [#allocation5], 512
    $region61: #{electra_for_custom_classification.1} parent=1 // pred_fallthru
      _
    // Predicated region
    $region62: #{electra_for_custom_classification.1} parent=1 // pred_check
      _
    $region63: #{electra_for_custom_classification.1} parent=1 // pred_check_branch
      %121 = sbr.rel (0) target = $region65
    $region64: #{electra_for_custom_classification.1} parent=1 // pred_region
      %123 = dma.done [#allocation5], 512
    $region65: #{electra_for_custom_classification.1} parent=1 // pred_fallthru
      _
    // Predicated region
    $region66: #{electra_for_custom_classification.1} parent=1 // pred_check
      _
    $region67: #{electra_for_custom_classification.1} parent=1 // pred_check_branch
      %125 = sbr.rel (0) target = $region69
    $region68: #{electra_for_custom_classification.1} parent=1 // pred_region
      %127 = dma.done [#allocation8], 1024
    $region69: #{electra_for_custom_classification.1} parent=1 // pred_fallthru
      _
    // Predicated region
    $region70: #{electra_for_custom_classification.1} parent=1 // pred_check
      _
    $region71: #{electra_for_custom_classification.1} parent=1 // pred_check_branch
      %129 = sbr.rel (0) target = $region73
    $region72: #{electra_for_custom_classification.1} parent=1 // pred_region
      %131 = dma.done [#allocation8], 1024
    $region73: #{electra_for_custom_classification.1} parent=1 // pred_fallthru
      _
    // Predicated region
    $region74: #{electra_for_custom_classification.1} parent=1 // pred_check
      _
    $region75: #{electra_for_custom_classification.1} parent=1 // pred_check_branch
      %133 = sbr.rel (0) target = $region77
    $region76: #{electra_for_custom_classification.1} parent=1 // pred_region
      %135 = dma.done [#allocation11], 256
    $region77: #{electra_for_custom_classification.1} parent=1 // pred_fallthru
      _
    %v137 = vld [vmem:[%s0] sm:$0xff]
    %v138 = vld [vmem:[%s0 + $0x8] sm:$0xff]
    %v139 = vld [vmem:[%s1] sm:$0x1]
    %v140 = vld [vmem:[%s1 + $0x1] sm:$0x1]
    %vm141 = vcmask 261120
    %v142 = vsel %vm141, %v137, 0.0
    %143 = vadd.xlane.f32.xlu0 %v142
    %v144 = vpop.xlane.xlu0 %143
    %v145 = vsel %vm141, %v138, 0.0
    %146 = vadd.xlane.f32.xlu0 %v145
    %v147 = vpop.xlane.xlu0 %146
    %v148 = vrcp.pop 32.0
    %v149 = vmul.f32 32.0, %v148
    %v150 = vsub.f32 1.0, %v149
    %v151 = vmul.f32 %v148, %v150
    %v152 = vadd.f32 %v148, %v151
    %vm153 = vweird.f32 %v148
    %v154 = vsel %vm153, %v148, %v152
    %v155 = vmul.f32 %v144, %v154
    %v156 = vmul.f32 %v147, %v154
    %v157 = vsub.f32 %v137, %v155
    %v158 = vsub.f32 %v138, %v156
    %v159 = vmul.f32 %v157, %v157
    %v160 = vmul.f32 %v158, %v158
    %v161 = vsel %vm141, %v159, 0.0
    %162 = vadd.xlane.f32.xlu0 %v161
    %v163 = vpop.xlane.xlu0 %162
    %v164 = vsel %vm141, %v160, 0.0
    %165 = vadd.xlane.f32.xlu0 %v164
    %v166 = vpop.xlane.xlu0 %165
    %v167 = vmul.f32 %v163, %v154
    %v168 = vmul.f32 %v166, %v154
    %v169 = vadd.f32 %v167, 1e-12
    %v170 = vadd.f32 %v168, 1e-12
    %v171 = vrsqrt.pop %v169
    %v172 = vmul.f32 %v171, %v169
    %v173 = vmul.f32 %v172, %v171
    %v174 = vmul.f32 0.5, %v173
    %v175 = vsub.f32 1.5, %v174
    %v176 = vmul.f32 %v171, %v175
    %vm177 = vweird.f32 %v169
    %vm178 = vweird.f32 %v171
    %vm179 = vmor %vm177, %vm178
    %v180 = vsel %vm179, %v171, %v176
    %v181 = vrsqrt.pop %v170
    %v182 = vmul.f32 %v181, %v170
    %v183 = vmul.f32 %v182, %v181
    %v184 = vmul.f32 0.5, %v183
    %v185 = vsub.f32 1.5, %v184
    %v186 = vmul.f32 %v181, %v185
    %vm187 = vweird.f32 %v170
    %vm188 = vweird.f32 %v181
    %vm189 = vmor %vm187, %vm188
    %v190 = vsel %vm189, %v181, %v186
    %v191 = vmul.f32 %v157, %v180
    %v192 = vmul.f32 %v158, %v190
    %v193 = vperm.slane %v139, 0
    %v194 = vmul.f32 %v191, %v193
    %v195 = vmul.f32 %v192, %v193
    %v196 = vperm.slane %v140, 0
    %v197 = vadd.f32 %v194, %v196
    %v198 = vadd.f32 %v195, %v196
    %v199 = vld [vmem:[%s2] sm:$0x3]
    %v201 = vrot.slane %v199, 1
    %v202 = vld [vmem:[%s7] sm:$0xff]
    %v203 = vpack.c.bf16 %v198, %v197
    %v204 = vld [vmem:[#allocation2] sm:$0xf]
    %v205 = vld [vmem:[#allocation2 + $0x4] sm:$0xf]
    %v206 = vld [vmem:[#allocation2 + $0x8] sm:$0xf]
    %v207 = vld [vmem:[#allocation2 + $0xc] sm:$0xf]
    %v208 = vperm.slane %v202, 0
    %v213 = vunpack.c.l.b16 %v204
    %v214 = vunpack.c.l.b16 %v205
    %v215 = vunpack.c.l.b16 %v206
    %v216 = vunpack.c.l.b16 %v207
    %v217 = vpack.c.b16 %v214, %v213
    %v218 = vpack.c.b16 %v216, %v215
    %v222 = vsel %vm141, %v203, 0
    %224 = vmatpush.bf16.msra.mxu0 0
    %225 = vmatpush.bf16.msra.mxu0 0
    %226 = vmatpush.bf16.msra.mxu0 0
    %227 = vmatpush.bf16.msra.mxu0 0
    %228 = vmatpush.bf16.msra.mxu0 0
    %229 = vmatpush.bf16.msra.mxu0 0
    %230 = vmatpush.bf16.msra.mxu0 %v218
    %231 = vmatpush.bf16.msra.mxu0 %v217
    %232 = vmatmul.bf16.gmra.mxu0 %v222
    %v233 = vpop.f32.mrf.mxu0
    %v234 = vadd.f32 %v208, %v233
    %v235 = vpop.f32.mrf.mxu0
    %v236 = vadd.f32 %v208, %v235
    %237 = vdwg.mxu0
    %v238 = vpack.c.bf16 %v234, %v234
    %v239 = vpack.c.bf16 %v236, %v236
    %v241 = vunpack.c.l.b16 %v238
    %v242 = vpack.c.b16 %v241, %v241
    %243 = vrot.lane.b32.xlu0 %v242, 96
    %v244 = vpop.permute.xlu0 %243
    %vm245 = vcmask 130048
    %v247 = vsel %vm245, %v238, 0
    %v250 = vsel %vm245, %v244, 0
    %252 = vmatpush.bf16.xpose.msra.mxu0 0
    %253 = vmatpush.bf16.xpose.msra.mxu0 0
    %254 = vmatpush.bf16.xpose.msra.mxu0 0
    %255 = vmatpush.bf16.xpose.msra.mxu0 0
    %256 = vmatpush.bf16.xpose.msra.mxu0 0
    %257 = vmatpush.bf16.xpose.msra.mxu0 0
    %258 = vmatpush.bf16.xpose.msra.mxu0 0
    %259 = vmatpush.bf16.xpose.msra.mxu0 %v250
    %260 = vmatmul.bf16.gmra.mxu0 %v247
    %v261 = vpop.f32.mrf.mxu0
    %v262 = vadd.f32 0.0, %v261
    %v263 = vpop.f32.mrf.mxu0
    %264 = vdwg.mxu0
    %v266 = vunpack.c.l.b16 %v239
    %v267 = vpack.c.b16 %v266, %v266
    %268 = vrot.lane.b32.xlu0 %v267, 96
    %v269 = vpop.permute.xlu0 %268
    %v271 = vsel %vm245, %v239, 0
    %v274 = vsel %vm245, %v269, 0
    %276 = vmatpush.bf16.xpose.msra.mxu0 0
    %277 = vmatpush.bf16.xpose.msra.mxu0 0
    %278 = vmatpush.bf16.xpose.msra.mxu0 0
    %279 = vmatpush.bf16.xpose.msra.mxu0 0
    %280 = vmatpush.bf16.xpose.msra.mxu0 0
    %281 = vmatpush.bf16.xpose.msra.mxu0 0
    %282 = vmatpush.bf16.xpose.msra.mxu0 0
    %283 = vmatpush.bf16.xpose.msra.mxu0 %v274
    %284 = vmatmul.bf16.gmra.mxu0 %v271
    %v285 = vpop.f32.mrf.mxu0
    %v286 = vadd.f32 0.0, %v285
    %v287 = vpop.f32.mrf.mxu0
    %288 = vdwg.mxu0
    %v289 = vmul.f32 %v262, 0.25
    %v290 = vmul.f32 %v286, 0.25
    %v291 = vperm.slane %v199, 0
    %v292 = vperm.slane %v201, 0
    %v295 = vadd.f32 %v289, %v291
    %v296 = vadd.f32 %v290, %v292
    %vm297 = vcmask 64512
    %v298 = vsel %vm297, %v295, -inf
    %299 = vmax.xlane.f32.xlu0 %v298
    %v300 = vpop.xlane.xlu0 %299
    %v301 = vsel %vm297, %v296, -inf
    %302 = vmax.xlane.f32.xlu0 %v301
    %v303 = vpop.xlane.xlu0 %302
    %v304 = vsub.f32 %v295, %v300
    %v305 = vsub.f32 %v296, %v303
    %v306 = vmul.f32 %v304, 1.442695
    %v307 = vpow.pop %v306
    %v308 = vmul.f32 %v305, 1.442695
    %v309 = vpow.pop %v308
    %v310 = vsel %vm297, %v307, 0.0
    %311 = vadd.xlane.f32.xlu0 %v310
    %v312 = vpop.xlane.xlu0 %311
    %v313 = vsel %vm297, %v309, 0.0
    %314 = vadd.xlane.f32.xlu0 %v313
    %v315 = vpop.xlane.xlu0 %314
    %v316 = vrcp.pop %v312
    %v317 = vrcp.pop %v315
    %v318 = vmul.f32 %v307, %v316
    %v319 = vmul.f32 %v309, %v317
    %v320 = vpack.c.bf16 %v318, %v318
    %v321 = vpack.c.bf16 %v319, %v319
    %322 = vrot.lane.b32.xlu0 %v242, 64
    %v323 = vpop.permute.xlu0 %322
    %v325 = vsel %vm297, %v320, 0
    %vm327 = vcmask 1043456
    %v329 = vsel %vm327, %v323, 0
    %331 = vmatpush.bf16.msra.mxu0 0
    %332 = vmatpush.bf16.msra.mxu0 0
    %333 = vmatpush.bf16.msra.mxu0 0
    %334 = vmatpush.bf16.msra.mxu0 0
    %335 = vmatpush.bf16.msra.mxu0 0
    %336 = vmatpush.bf16.msra.mxu0 0
    %337 = vmatpush.bf16.msra.mxu0 0
    %338 = vmatpush.bf16.msra.mxu0 %v329
    %339 = vmatmul.bf16.gmra.mxu0 %v325
    %v340 = vpop.f32.mrf.mxu0
    %v341 = vadd.f32 0.0, %v340
    %v342 = vpop.f32.mrf.mxu0
    %343 = vdwg.mxu0
    %344 = vrot.lane.b32.xlu0 %v267, 64
    %v345 = vpop.permute.xlu0 %344
    %v347 = vsel %vm297, %v321, 0
    %v350 = vsel %vm327, %v345, 0
    %352 = vmatpush.bf16.msra.mxu0 0
    %353 = vmatpush.bf16.msra.mxu0 0
    %354 = vmatpush.bf16.msra.mxu0 0
    %355 = vmatpush.bf16.msra.mxu0 0
    %356 = vmatpush.bf16.msra.mxu0 0
    %357 = vmatpush.bf16.msra.mxu0 0
    %358 = vmatpush.bf16.msra.mxu0 0
    %359 = vmatpush.bf16.msra.mxu0 %v350
    %360 = vmatmul.bf16.gmra.mxu0 %v347
    %v361 = vpop.f32.mrf.mxu0
    %v362 = vadd.f32 0.0, %v361
    %v363 = vpop.f32.mrf.mxu0
    %364 = vdwg.mxu0
    %v365 = vpack.c.bf16 %v362, %v341
    %v366 = vld [vmem:[#allocation4] sm:$0xf]
    %v367 = vld [vmem:[#allocation4 + $0x4] sm:$0xf]
    %368 = vrot.lane.b32.xlu0 %v242, 112
    %v369 = vpop.permute.xlu0 %368
    %370 = vrot.lane.b32.xlu0 %v242, 80
    %v371 = vpop.permute.xlu0 %370
    %v373 = vsel %vm245, %v369, 0
    %v376 = vsel %vm245, %v371, 0
    %378 = vmatpush.bf16.xpose.msra.mxu0 0
    %379 = vmatpush.bf16.xpose.msra.mxu0 0
    %380 = vmatpush.bf16.xpose.msra.mxu0 0
    %381 = vmatpush.bf16.xpose.msra.mxu0 0
    %382 = vmatpush.bf16.xpose.msra.mxu0 0
    %383 = vmatpush.bf16.xpose.msra.mxu0 0
    %384 = vmatpush.bf16.xpose.msra.mxu0 0
    %385 = vmatpush.bf16.xpose.msra.mxu0 %v376
    %386 = vmatmul.bf16.gmra.mxu0 %v373
    %v387 = vpop.f32.mrf.mxu0
    %v388 = vadd.f32 0.0, %v387
    %v389 = vpop.f32.mrf.mxu0
    %390 = vdwg.mxu0
    %391 = vrot.lane.b32.xlu0 %v267, 112
    %v392 = vpop.permute.xlu0 %391
    %393 = vrot.lane.b32.xlu0 %v267, 80
    %v394 = vpop.permute.xlu0 %393
    %v396 = vsel %vm245, %v392, 0
    %v399 = vsel %vm245, %v394, 0
    %401 = vmatpush.bf16.xpose.msra.mxu0 0
    %402 = vmatpush.bf16.xpose.msra.mxu0 0
    %403 = vmatpush.bf16.xpose.msra.mxu0 0
    %404 = vmatpush.bf16.xpose.msra.mxu0 0
    %405 = vmatpush.bf16.xpose.msra.mxu0 0
    %406 = vmatpush.bf16.xpose.msra.mxu0 0
    %407 = vmatpush.bf16.xpose.msra.mxu0 0
    %408 = vmatpush.bf16.xpose.msra.mxu0 %v399
    %409 = vmatmul.bf16.gmra.mxu0 %v396
    %v410 = vpop.f32.mrf.mxu0
    %v411 = vadd.f32 0.0, %v410
    %v412 = vpop.f32.mrf.mxu0
    %413 = vdwg.mxu0
    %v414 = vmul.f32 %v388, 0.25
    %v415 = vmul.f32 %v411, 0.25
    %v416 = vadd.f32 %v414, %v291
    %v417 = vadd.f32 %v415, %v292
    %v418 = vsel %vm297, %v416, -inf
    %419 = vmax.xlane.f32.xlu0 %v418
    %v420 = vpop.xlane.xlu0 %419
    %v421 = vsel %vm297, %v417, -inf
    %422 = vmax.xlane.f32.xlu0 %v421
    %v423 = vpop.xlane.xlu0 %422
    %v424 = vsub.f32 %v416, %v420
    %v425 = vsub.f32 %v417, %v423
    %v426 = vmul.f32 %v424, 1.442695
    %v427 = vpow.pop %v426
    %v428 = vmul.f32 %v425, 1.442695
    %v429 = vpow.pop %v428
    %v430 = vsel %vm297, %v427, 0.0
    %431 = vadd.xlane.f32.xlu0 %v430
    %v432 = vpop.xlane.xlu0 %431
    %v433 = vsel %vm297, %v429, 0.0
    %434 = vadd.xlane.f32.xlu0 %v433
    %v435 = vpop.xlane.xlu0 %434
    %v436 = vrcp.pop %v432
    %v437 = vrcp.pop %v435
    %v438 = vmul.f32 %v427, %v436
    %v439 = vmul.f32 %v429, %v437
    %v440 = vpack.c.bf16 %v438, %v438
    %v441 = vpack.c.bf16 %v439, %v439
    %442 = vrot.lane.b32.xlu0 %v242, 48
    %v443 = vpop.permute.xlu0 %442
    %v445 = vsel %vm297, %v440, 0
    %v448 = vsel %vm327, %v443, 0
    %450 = vmatpush.bf16.msra.mxu0 0
    %451 = vmatpush.bf16.msra.mxu0 0
    %452 = vmatpush.bf16.msra.mxu0 0
    %453 = vmatpush.bf16.msra.mxu0 0
    %454 = vmatpush.bf16.msra.mxu0 0
    %455 = vmatpush.bf16.msra.mxu0 0
    %456 = vmatpush.bf16.msra.mxu0 0
    %457 = vmatpush.bf16.msra.mxu0 %v448
    %458 = vmatmul.bf16.gmra.mxu0 %v445
    %v459 = vpop.f32.mrf.mxu0
    %v460 = vadd.f32 0.0, %v459
    %v461 = vpop.f32.mrf.mxu0
    %462 = vdwg.mxu0
    %463 = vrot.lane.b32.xlu0 %v267, 48
    %v464 = vpop.permute.xlu0 %463
    %v466 = vsel %vm297, %v441, 0
    %v469 = vsel %vm327, %v464, 0
    %471 = vmatpush.bf16.msra.mxu0 0
    %472 = vmatpush.bf16.msra.mxu0 0
    %473 = vmatpush.bf16.msra.mxu0 0
    %474 = vmatpush.bf16.msra.mxu0 0
    %475 = vmatpush.bf16.msra.mxu0 0
    %476 = vmatpush.bf16.msra.mxu0 0
    %477 = vmatpush.bf16.msra.mxu0 0
    %478 = vmatpush.bf16.msra.mxu0 %v469
    %479 = vmatmul.bf16.gmra.mxu0 %v466
    %v480 = vpop.f32.mrf.mxu0
    %v481 = vadd.f32 0.0, %v480
    %v482 = vpop.f32.mrf.mxu0
    %483 = vdwg.mxu0
    %v484 = vpack.c.bf16 %v481, %v460
    %s485 = scalar_lea.vmem [#allocation4], 8
    %v486 = vld [vmem:[%s485] sm:$0xf]
    %v487 = vld [vmem:[%s485 + $0x4] sm:$0xf]
    %v490 = vunpack.c.l.b16 %v486
    %v491 = vunpack.c.l.b16 %v487
    %v492 = vpack.c.b16 %v491, %v490
    %v495 = vsel %vm245, %v484, 0
    %497 = vmatpush.bf16.msra.mxu0 0
    %498 = vmatpush.bf16.msra.mxu0 0
    %499 = vmatpush.bf16.msra.mxu0 0
    %500 = vmatpush.bf16.msra.mxu0 0
    %501 = vmatpush.bf16.msra.mxu0 0
    %502 = vmatpush.bf16.msra.mxu0 0
    %503 = vmatpush.bf16.msra.mxu0 0
    %504 = vmatpush.bf16.msra.mxu0 %v492
    %505 = vmatmul.bf16.gmra.mxu0 %v495
    %v506 = vpop.f32.mrf.mxu0
    %v507 = vadd.f32 0.0, %v506
    %v508 = vpop.f32.mrf.mxu0
    %v509 = vadd.f32 0.0, %v508
    %510 = vdwg.mxu0
    %v513 = vunpack.c.l.b16 %v366
    %v514 = vunpack.c.l.b16 %v367
    %v515 = vpack.c.b16 %v514, %v513
    %v518 = vsel %vm245, %v365, 0
    %520 = vmatpush.bf16.msra.mxu0 0
    %521 = vmatpush.bf16.msra.mxu0 0
    %522 = vmatpush.bf16.msra.mxu0 0
    %523 = vmatpush.bf16.msra.mxu0 0
    %524 = vmatpush.bf16.msra.mxu0 0
    %525 = vmatpush.bf16.msra.mxu0 0
    %526 = vmatpush.bf16.msra.mxu0 0
    %527 = vmatpush.bf16.msra.mxu0 %v515
    %528 = vmatmul.bf16.gmra.mxu0 %v518
    %v529 = vpop.f32.mrf.mxu0
    %v530 = vadd.f32 %v507, %v529
    %v531 = vpop.f32.mrf.mxu0
    %v532 = vadd.f32 %v509, %v531
    %533 = vdwg.mxu0
    %v534 = vadd.f32 %v197, %v530
    %v535 = vadd.f32 %v198, %v532
    %v536 = vperm.slane %v202, 1
    %v537 = vadd.f32 %v534, %v536
    %v538 = vadd.f32 %v535, %v536
    %v539 = vsel %vm141, %v537, 0.0
    %540 = vadd.xlane.f32.xlu0 %v539
    %v541 = vpop.xlane.xlu0 %540
    %v542 = vsel %vm141, %v538, 0.0
    %543 = vadd.xlane.f32.xlu0 %v542
    %v544 = vpop.xlane.xlu0 %543
    %v545 = vmul.f32 %v541, %v154
    %v546 = vmul.f32 %v544, %v154
    %v547 = vsub.f32 %v537, %v545
    %v548 = vsub.f32 %v538, %v546
    %v549 = vmul.f32 %v547, %v547
    %v550 = vmul.f32 %v548, %v548
    %v551 = vsel %vm141, %v549, 0.0
    %552 = vadd.xlane.f32.xlu0 %v551
    %v553 = vpop.xlane.xlu0 %552
    %v554 = vsel %vm141, %v550, 0.0
    %555 = vadd.xlane.f32.xlu0 %v554
    %v556 = vpop.xlane.xlu0 %555
    %v557 = vmul.f32 %v553, %v154
    %v558 = vmul.f32 %v556, %v154
    %v559 = vadd.f32 %v557, 1e-12
    %v560 = vadd.f32 %v558, 1e-12
    %v561 = vrsqrt.pop %v559
    %v562 = vmul.f32 %v561, %v559
    %v563 = vmul.f32 %v562, %v561
    %v564 = vmul.f32 0.5, %v563
    %v565 = vsub.f32 1.5, %v564
    %v566 = vmul.f32 %v561, %v565
    %vm567 = vweird.f32 %v559
    %vm568 = vweird.f32 %v561
    %vm569 = vmor %vm567, %vm568
    %v570 = vsel %vm569, %v561, %v566
    %v571 = vrsqrt.pop %v560
    %v572 = vmul.f32 %v571, %v560
    %v573 = vmul.f32 %v572, %v571
    %v574 = vmul.f32 0.5, %v573
    %v575 = vsub.f32 1.5, %v574
    %v576 = vmul.f32 %v571, %v575
    %vm577 = vweird.f32 %v560
    %vm578 = vweird.f32 %v571
    %vm579 = vmor %vm577, %vm578
    %v580 = vsel %vm579, %v571, %v576
    %v581 = vmul.f32 %v547, %v570
    %v582 = vmul.f32 %v548, %v580
    %v583 = vperm.slane %v202, 2
    %v584 = vmul.f32 %v581, %v583
    %v585 = vmul.f32 %v582, %v583
    %v586 = vperm.slane %v202, 3
    %v587 = vadd.f32 %v584, %v586
    %v588 = vadd.f32 %v585, %v586
    %v589 = vpack.c.bf16 %v588, %v587
    %v590 = vld [vmem:[#allocation6] sm:$0xf]
    %v591 = vld [vmem:[#allocation6 + $0x4] sm:$0xf]
    %v592 = vld [vmem:[#allocation6 + $0x8] sm:$0xf]
    %v593 = vld [vmem:[#allocation6 + $0xc] sm:$0xf]
    %v594 = vperm.slane %v202, 4
    %v599 = vunpack.c.l.b16 %v590
    %v600 = vunpack.c.l.b16 %v591
    %v601 = vunpack.c.l.b16 %v592
    %v602 = vunpack.c.l.b16 %v593
    %v603 = vpack.c.b16 %v600, %v599
    %v604 = vpack.c.b16 %v602, %v601
    %v608 = vsel %vm141, %v589, 0
    %610 = vmatpush.bf16.msra.mxu0 0
    %611 = vmatpush.bf16.msra.mxu0 0
    %612 = vmatpush.bf16.msra.mxu0 0
    %613 = vmatpush.bf16.msra.mxu0 0
    %614 = vmatpush.bf16.msra.mxu0 0
    %615 = vmatpush.bf16.msra.mxu0 0
    %616 = vmatpush.bf16.msra.mxu0 %v604
    %617 = vmatpush.bf16.msra.mxu0 %v603
    %618 = vmatmul.bf16.gmra.mxu0 %v608
    %v619 = vpop.f32.mrf.mxu0
    %v620 = vadd.f32 %v594, %v619
    %v621 = vpop.f32.mrf.mxu0
    %v622 = vadd.f32 %v594, %v621
    %623 = vdwg.mxu0
    %v624 = vmul.f32 %v620, %v620
    %v625 = vmul.f32 %v622, %v622
    %v626 = vmul.f32 %v620, %v624
    %v627 = vmul.f32 %v622, %v625
    %v628 = vmul.f32 %v626, 0.044715
    %v629 = vmul.f32 %v627, 0.044715
    %v630 = vadd.f32 %v620, %v628
    %v631 = vadd.f32 %v622, %v629
    %v632 = vmul.f32 %v630, 0.7978846
    %v633 = vmul.f32 %v631, 0.7978846
    %v634 = vtanh.pop %v632
    %v635 = vtanh.pop %v633
    %v636 = vadd.f32 %v634, 1.0
    %v637 = vadd.f32 %v635, 1.0
    %v638 = vmul.f32 %v636, 0.5
    %v639 = vmul.f32 %v637, 0.5
    %v640 = vmul.f32 %v620, %v638
    %v641 = vmul.f32 %v622, %v639
    %v642 = vpack.c.bf16 %v641, %v640
    %v643 = vld [vmem:[%s6] sm:$0xf]
    %v644 = vld [vmem:[%s6 + $0x4] sm:$0xf]
    %v645 = vld [vmem:[%s6 + $0x8] sm:$0xf]
    %v646 = vld [vmem:[%s6 + $0xc] sm:$0xf]
    %v647 = vld [vmem:[%s6 + $0x10] sm:$0xf]
    %v648 = vld [vmem:[%s6 + $0x14] sm:$0xf]
    %v649 = vld [vmem:[%s6 + $0x18] sm:$0xf]
    %v650 = vld [vmem:[%s6 + $0x1c] sm:$0xf]
    %v651 = vperm.slane %v202, 5
    %v660 = vunpack.c.l.b16 %v643
    %v661 = vunpack.c.l.b16 %v644
    %v662 = vunpack.c.l.b16 %v645
    %v663 = vunpack.c.l.b16 %v646
    %v664 = vunpack.c.l.b16 %v647
    %v665 = vunpack.c.l.b16 %v648
    %v666 = vunpack.c.l.b16 %v649
    %v667 = vunpack.c.l.b16 %v650
    %v668 = vpack.c.b16 %v661, %v660
    %v669 = vpack.c.b16 %v663, %v662
    %v670 = vpack.c.b16 %v665, %v664
    %v671 = vpack.c.b16 %v667, %v666
    %vm676 = vcmask 523264
    %v678 = vsel %vm676, %v642, 0
    %680 = vmatpush.bf16.msra.mxu0 0
    %681 = vmatpush.bf16.msra.mxu0 0
    %682 = vmatpush.bf16.msra.mxu0 0
    %683 = vmatpush.bf16.msra.mxu0 0
    %684 = vmatpush.bf16.msra.mxu0 %v671
    %685 = vmatpush.bf16.msra.mxu0 %v670
    %686 = vmatpush.bf16.msra.mxu0 %v669
    %687 = vmatpush.bf16.msra.mxu0 %v668
    %688 = vmatmul.bf16.gmra.mxu0 %v678
    %v689 = vpop.f32.mrf.mxu0
    %v690 = vadd.f32 %v651, %v689
    %v691 = vpop.f32.mrf.mxu0
    %v692 = vadd.f32 %v651, %v691
    %693 = vdwg.mxu0
    %v694 = vadd.f32 %v587, %v690
    %v695 = vadd.f32 %v588, %v692
    %v696 = vsel %vm141, %v694, 0.0
    %697 = vadd.xlane.f32.xlu0 %v696
    %v698 = vpop.xlane.xlu0 %697
    %v699 = vsel %vm141, %v695, 0.0
    %700 = vadd.xlane.f32.xlu0 %v699
    %v701 = vpop.xlane.xlu0 %700
    %v702 = vmul.f32 %v698, %v154
    %v703 = vmul.f32 %v701, %v154
    %v704 = vsub.f32 %v694, %v702
    %v705 = vsub.f32 %v695, %v703
    %v706 = vmul.f32 %v704, %v704
    %v707 = vmul.f32 %v705, %v705
    %v708 = vsel %vm141, %v706, 0.0
    %709 = vadd.xlane.f32.xlu0 %v708
    %v710 = vpop.xlane.xlu0 %709
    %v711 = vsel %vm141, %v707, 0.0
    %712 = vadd.xlane.f32.xlu0 %v711
    %v713 = vpop.xlane.xlu0 %712
    %v714 = vmul.f32 %v710, %v154
    %v715 = vmul.f32 %v713, %v154
    %v716 = vadd.f32 %v714, 1e-12
    %v717 = vadd.f32 %v715, 1e-12
    %v718 = vrsqrt.pop %v716
    %v719 = vmul.f32 %v718, %v716
    %v720 = vmul.f32 %v719, %v718
    %v721 = vmul.f32 0.5, %v720
    %v722 = vsub.f32 1.5, %v721
    %v723 = vmul.f32 %v718, %v722
    %vm724 = vweird.f32 %v716
    %vm725 = vweird.f32 %v718
    %vm726 = vmor %vm724, %vm725
    %v727 = vsel %vm726, %v718, %v723
    %v728 = vrsqrt.pop %v717
    %v729 = vmul.f32 %v728, %v717
    %v730 = vmul.f32 %v729, %v728
    %v731 = vmul.f32 0.5, %v730
    %v732 = vsub.f32 1.5, %v731
    %v733 = vmul.f32 %v728, %v732
    %vm734 = vweird.f32 %v717
    %vm735 = vweird.f32 %v728
    %vm736 = vmor %vm734, %vm735
    %v737 = vsel %vm736, %v728, %v733
    %v738 = vmul.f32 %v704, %v727
    %v739 = vmul.f32 %v705, %v737
    %v740 = vperm.slane %v202, 6
    %v741 = vmul.f32 %v738, %v740
    %v742 = vmul.f32 %v739, %v740
    %v743 = vperm.slane %v202, 7
    %v744 = vadd.f32 %v741, %v743
    %v745 = vadd.f32 %v742, %v743
    %s746 = scalar_lea.vmem %s7, 8
    %v747 = vld [vmem:[%s746] sm:$0xff]
    %v748 = vpack.c.bf16 %v745, %v744
    %s749 = scalar_lea.vmem [#allocation2], 16
    %v750 = vld [vmem:[%s749] sm:$0xf]
    %v751 = vld [vmem:[%s749 + $0x4] sm:$0xf]
    %v752 = vld [vmem:[%s749 + $0x8] sm:$0xf]
    %v753 = vld [vmem:[%s749 + $0xc] sm:$0xf]
    %v754 = vperm.slane %v747, 0
    %v759 = vunpack.c.l.b16 %v750
    %v760 = vunpack.c.l.b16 %v751
    %v761 = vunpack.c.l.b16 %v752
    %v762 = vunpack.c.l.b16 %v753
    %v763 = vpack.c.b16 %v760, %v759
    %v764 = vpack.c.b16 %v762, %v761
    %v768 = vsel %vm141, %v748, 0
    %770 = vmatpush.bf16.msra.mxu0 0
    %771 = vmatpush.bf16.msra.mxu0 0
    %772 = vmatpush.bf16.msra.mxu0 0
    %773 = vmatpush.bf16.msra.mxu0 0
    %774 = vmatpush.bf16.msra.mxu0 0
    %775 = vmatpush.bf16.msra.mxu0 0
    %776 = vmatpush.bf16.msra.mxu0 %v764
    %777 = vmatpush.bf16.msra.mxu0 %v763
    %778 = vmatmul.bf16.gmra.mxu0 %v768
    %v779 = vpop.f32.mrf.mxu0
    %v780 = vadd.f32 %v754, %v779
    %v781 = vpop.f32.mrf.mxu0
    %v782 = vadd.f32 %v754, %v781
    %783 = vdwg.mxu0
    %v784 = vpack.c.bf16 %v780, %v780
    %v785 = vpack.c.bf16 %v782, %v782
    %v787 = vunpack.c.l.b16 %v784
    %v788 = vpack.c.b16 %v787, %v787
    %789 = vrot.lane.b32.xlu0 %v788, 96
    %v790 = vpop.permute.xlu0 %789
    %v792 = vsel %vm245, %v784, 0
    %v795 = vsel %vm245, %v790, 0
    %797 = vmatpush.bf16.xpose.msra.mxu0 0
    %798 = vmatpush.bf16.xpose.msra.mxu0 0
    %799 = vmatpush.bf16.xpose.msra.mxu0 0
    %800 = vmatpush.bf16.xpose.msra.mxu0 0
    %801 = vmatpush.bf16.xpose.msra.mxu0 0
    %802 = vmatpush.bf16.xpose.msra.mxu0 0
    %803 = vmatpush.bf16.xpose.msra.mxu0 0
    %804 = vmatpush.bf16.xpose.msra.mxu0 %v795
    %805 = vmatmul.bf16.gmra.mxu0 %v792
    %v806 = vpop.f32.mrf.mxu0
    %v807 = vadd.f32 0.0, %v806
    %v808 = vpop.f32.mrf.mxu0
    %809 = vdwg.mxu0
    %v811 = vunpack.c.l.b16 %v785
    %v812 = vpack.c.b16 %v811, %v811
    %813 = vrot.lane.b32.xlu0 %v812, 96
    %v814 = vpop.permute.xlu0 %813
    %v816 = vsel %vm245, %v785, 0
    %v819 = vsel %vm245, %v814, 0
    %821 = vmatpush.bf16.xpose.msra.mxu0 0
    %822 = vmatpush.bf16.xpose.msra.mxu0 0
    %823 = vmatpush.bf16.xpose.msra.mxu0 0
    %824 = vmatpush.bf16.xpose.msra.mxu0 0
    %825 = vmatpush.bf16.xpose.msra.mxu0 0
    %826 = vmatpush.bf16.xpose.msra.mxu0 0
    %827 = vmatpush.bf16.xpose.msra.mxu0 0
    %828 = vmatpush.bf16.xpose.msra.mxu0 %v819
    %829 = vmatmul.bf16.gmra.mxu0 %v816
    %v830 = vpop.f32.mrf.mxu0
    %v831 = vadd.f32 0.0, %v830
    %v832 = vpop.f32.mrf.mxu0
    %833 = vdwg.mxu0
    %v834 = vmul.f32 %v807, 0.25
    %v835 = vmul.f32 %v831, 0.25
    %v836 = vadd.f32 %v834, %v291
    %v837 = vadd.f32 %v835, %v292
    %v838 = vsel %vm297, %v836, -inf
    %839 = vmax.xlane.f32.xlu0 %v838
    %v840 = vpop.xlane.xlu0 %839
    %v841 = vsel %vm297, %v837, -inf
    %842 = vmax.xlane.f32.xlu0 %v841
    %v843 = vpop.xlane.xlu0 %842
    %v844 = vsub.f32 %v836, %v840
    %v845 = vsub.f32 %v837, %v843
    %v846 = vmul.f32 %v844, 1.442695
    %v847 = vpow.pop %v846
    %v848 = vmul.f32 %v845, 1.442695
    %v849 = vpow.pop %v848
    %v850 = vsel %vm297, %v847, 0.0
    %851 = vadd.xlane.f32.xlu0 %v850
    %v852 = vpop.xlane.xlu0 %851
    %v853 = vsel %vm297, %v849, 0.0
    %854 = vadd.xlane.f32.xlu0 %v853
    %v855 = vpop.xlane.xlu0 %854
    %v856 = vrcp.pop %v852
    %v857 = vrcp.pop %v855
    %v858 = vmul.f32 %v847, %v856
    %v859 = vmul.f32 %v849, %v857
    %v860 = vpack.c.bf16 %v858, %v858
    %v861 = vpack.c.bf16 %v859, %v859
    %862 = vrot.lane.b32.xlu0 %v788, 64
    %v863 = vpop.permute.xlu0 %862
    %v865 = vsel %vm297, %v860, 0
    %v868 = vsel %vm327, %v863, 0
    %870 = vmatpush.bf16.msra.mxu0 0
    %871 = vmatpush.bf16.msra.mxu0 0
    %872 = vmatpush.bf16.msra.mxu0 0
    %873 = vmatpush.bf16.msra.mxu0 0
    %874 = vmatpush.bf16.msra.mxu0 0
    %875 = vmatpush.bf16.msra.mxu0 0
    %876 = vmatpush.bf16.msra.mxu0 0
    %877 = vmatpush.bf16.msra.mxu0 %v868
    %878 = vmatmul.bf16.gmra.mxu0 %v865
    %v879 = vpop.f32.mrf.mxu0
    %v880 = vadd.f32 0.0, %v879
    %v881 = vpop.f32.mrf.mxu0
    %882 = vdwg.mxu0
    %883 = vrot.lane.b32.xlu0 %v812, 64
    %v884 = vpop.permute.xlu0 %883
    %v886 = vsel %vm297, %v861, 0
    %v889 = vsel %vm327, %v884, 0
    %891 = vmatpush.bf16.msra.mxu0 0
    %892 = vmatpush.bf16.msra.mxu0 0
    %893 = vmatpush.bf16.msra.mxu0 0
    %894 = vmatpush.bf16.msra.mxu0 0
    %895 = vmatpush.bf16.msra.mxu0 0
    %896 = vmatpush.bf16.msra.mxu0 0
    %897 = vmatpush.bf16.msra.mxu0 0
    %898 = vmatpush.bf16.msra.mxu0 %v889
    %899 = vmatmul.bf16.gmra.mxu0 %v886
    %v900 = vpop.f32.mrf.mxu0
    %v901 = vadd.f32 0.0, %v900
    %v902 = vpop.f32.mrf.mxu0
    %903 = vdwg.mxu0
    %v904 = vpack.c.bf16 %v901, %v880
    %s905 = scalar_lea.vmem [#allocation4], 16
    %v906 = vld [vmem:[%s905] sm:$0xf]
    %v907 = vld [vmem:[%s905 + $0x4] sm:$0xf]
    %908 = vrot.lane.b32.xlu0 %v788, 112
    %v909 = vpop.permute.xlu0 %908
    %910 = vrot.lane.b32.xlu0 %v788, 80
    %v911 = vpop.permute.xlu0 %910
    %v913 = vsel %vm245, %v909, 0
    %v916 = vsel %vm245, %v911, 0
    %918 = vmatpush.bf16.xpose.msra.mxu0 0
    %919 = vmatpush.bf16.xpose.msra.mxu0 0
    %920 = vmatpush.bf16.xpose.msra.mxu0 0
    %921 = vmatpush.bf16.xpose.msra.mxu0 0
    %922 = vmatpush.bf16.xpose.msra.mxu0 0
    %923 = vmatpush.bf16.xpose.msra.mxu0 0
    %924 = vmatpush.bf16.xpose.msra.mxu0 0
    %925 = vmatpush.bf16.xpose.msra.mxu0 %v916
    %926 = vmatmul.bf16.gmra.mxu0 %v913
    %v927 = vpop.f32.mrf.mxu0
    %v928 = vadd.f32 0.0, %v927
    %v929 = vpop.f32.mrf.mxu0
    %930 = vdwg.mxu0
    %931 = vrot.lane.b32.xlu0 %v812, 112
    %v932 = vpop.permute.xlu0 %931
    %933 = vrot.lane.b32.xlu0 %v812, 80
    %v934 = vpop.permute.xlu0 %933
    %v936 = vsel %vm245, %v932, 0
    %v939 = vsel %vm245, %v934, 0
    %941 = vmatpush.bf16.xpose.msra.mxu0 0
    %942 = vmatpush.bf16.xpose.msra.mxu0 0
    %943 = vmatpush.bf16.xpose.msra.mxu0 0
    %944 = vmatpush.bf16.xpose.msra.mxu0 0
    %945 = vmatpush.bf16.xpose.msra.mxu0 0
    %946 = vmatpush.bf16.xpose.msra.mxu0 0
    %947 = vmatpush.bf16.xpose.msra.mxu0 0
    %948 = vmatpush.bf16.xpose.msra.mxu0 %v939
    %949 = vmatmul.bf16.gmra.mxu0 %v936
    %v950 = vpop.f32.mrf.mxu0
    %v951 = vadd.f32 0.0, %v950
    %v952 = vpop.f32.mrf.mxu0
    %953 = vdwg.mxu0
    %v954 = vmul.f32 %v928, 0.25
    %v955 = vmul.f32 %v951, 0.25
    %v956 = vadd.f32 %v954, %v291
    %v957 = vadd.f32 %v955, %v292
    %v958 = vsel %vm297, %v956, -inf
    %959 = vmax.xlane.f32.xlu0 %v958
    %v960 = vpop.xlane.xlu0 %959
    %v961 = vsel %vm297, %v957, -inf
    %962 = vmax.xlane.f32.xlu0 %v961
    %v963 = vpop.xlane.xlu0 %962
    %v964 = vsub.f32 %v956, %v960
    %v965 = vsub.f32 %v957, %v963
    %v966 = vmul.f32 %v964, 1.442695
    %v967 = vpow.pop %v966
    %v968 = vmul.f32 %v965, 1.442695
    %v969 = vpow.pop %v968
    %v970 = vsel %vm297, %v967, 0.0
    %971 = vadd.xlane.f32.xlu0 %v970
    %v972 = vpop.xlane.xlu0 %971
    %v973 = vsel %vm297, %v969, 0.0
    %974 = vadd.xlane.f32.xlu0 %v973
    %v975 = vpop.xlane.xlu0 %974
    %v976 = vrcp.pop %v972
    %v977 = vrcp.pop %v975
    %v978 = vmul.f32 %v967, %v976
    %v979 = vmul.f32 %v969, %v977
    %v980 = vpack.c.bf16 %v978, %v978
    %v981 = vpack.c.bf16 %v979, %v979
    %982 = vrot.lane.b32.xlu0 %v788, 48
    %v983 = vpop.permute.xlu0 %982
    %v985 = vsel %vm297, %v980, 0
    %v988 = vsel %vm327, %v983, 0
    %990 = vmatpush.bf16.msra.mxu0 0
    %991 = vmatpush.bf16.msra.mxu0 0
    %992 = vmatpush.bf16.msra.mxu0 0
    %993 = vmatpush.bf16.msra.mxu0 0
    %994 = vmatpush.bf16.msra.mxu0 0
    %995 = vmatpush.bf16.msra.mxu0 0
    %996 = vmatpush.bf16.msra.mxu0 0
    %997 = vmatpush.bf16.msra.mxu0 %v988
    %998 = vmatmul.bf16.gmra.mxu0 %v985
    %v999 = vpop.f32.mrf.mxu0
    %v1000 = vadd.f32 0.0, %v999
    %v1001 = vpop.f32.mrf.mxu0
    %1002 = vdwg.mxu0
    %1003 = vrot.lane.b32.xlu0 %v812, 48
    %v1004 = vpop.permute.xlu0 %1003
    %v1006 = vsel %vm297, %v981, 0
    %v1009 = vsel %vm327, %v1004, 0
    %1011 = vmatpush.bf16.msra.mxu0 0
    %1012 = vmatpush.bf16.msra.mxu0 0
    %1013 = vmatpush.bf16.msra.mxu0 0
    %1014 = vmatpush.bf16.msra.mxu0 0
    %1015 = vmatpush.bf16.msra.mxu0 0
    %1016 = vmatpush.bf16.msra.mxu0 0
    %1017 = vmatpush.bf16.msra.mxu0 0
    %1018 = vmatpush.bf16.msra.mxu0 %v1009
    %1019 = vmatmul.bf16.gmra.mxu0 %v1006
    %v1020 = vpop.f32.mrf.mxu0
    %v1021 = vadd.f32 0.0, %v1020
    %v1022 = vpop.f32.mrf.mxu0
    %1023 = vdwg.mxu0
    %v1024 = vpack.c.bf16 %v1021, %v1000
    %s1025 = scalar_lea.vmem [#allocation4], 24
    %v1026 = vld [vmem:[%s1025] sm:$0xf]
    %v1027 = vld [vmem:[%s1025 + $0x4] sm:$0xf]
    %v1030 = vunpack.c.l.b16 %v1026
    %v1031 = vunpack.c.l.b16 %v1027
    %v1032 = vpack.c.b16 %v1031, %v1030
    %v1035 = vsel %vm245, %v1024, 0
    %1037 = vmatpush.bf16.msra.mxu0 0
    %1038 = vmatpush.bf16.msra.mxu0 0
    %1039 = vmatpush.bf16.msra.mxu0 0
    %1040 = vmatpush.bf16.msra.mxu0 0
    %1041 = vmatpush.bf16.msra.mxu0 0
    %1042 = vmatpush.bf16.msra.mxu0 0
    %1043 = vmatpush.bf16.msra.mxu0 0
    %1044 = vmatpush.bf16.msra.mxu0 %v1032
    %1045 = vmatmul.bf16.gmra.mxu0 %v1035
    %v1046 = vpop.f32.mrf.mxu0
    %v1047 = vadd.f32 0.0, %v1046
    %v1048 = vpop.f32.mrf.mxu0
    %v1049 = vadd.f32 0.0, %v1048
    %1050 = vdwg.mxu0
    %v1053 = vunpack.c.l.b16 %v906
    %v1054 = vunpack.c.l.b16 %v907
    %v1055 = vpack.c.b16 %v1054, %v1053
    %v1058 = vsel %vm245, %v904, 0
    %1060 = vmatpush.bf16.msra.mxu0 0
    %1061 = vmatpush.bf16.msra.mxu0 0
    %1062 = vmatpush.bf16.msra.mxu0 0
    %1063 = vmatpush.bf16.msra.mxu0 0
    %1064 = vmatpush.bf16.msra.mxu0 0
    %1065 = vmatpush.bf16.msra.mxu0 0
    %1066 = vmatpush.bf16.msra.mxu0 0
    %1067 = vmatpush.bf16.msra.mxu0 %v1055
    %1068 = vmatmul.bf16.gmra.mxu0 %v1058
    %v1069 = vpop.f32.mrf.mxu0
    %v1070 = vadd.f32 %v1047, %v1069
    %v1071 = vpop.f32.mrf.mxu0
    %v1072 = vadd.f32 %v1049, %v1071
    %1073 = vdwg.mxu0
    %v1074 = vadd.f32 %v744, %v1070
    %v1075 = vadd.f32 %v745, %v1072
    %v1076 = vperm.slane %v747, 1
    %v1077 = vadd.f32 %v1074, %v1076
    %v1078 = vadd.f32 %v1075, %v1076
    %v1079 = vsel %vm141, %v1077, 0.0
    %1080 = vadd.xlane.f32.xlu0 %v1079
    %v1081 = vpop.xlane.xlu0 %1080
    %v1082 = vsel %vm141, %v1078, 0.0
    %1083 = vadd.xlane.f32.xlu0 %v1082
    %v1084 = vpop.xlane.xlu0 %1083
    %v1085 = vmul.f32 %v1081, %v154
    %v1086 = vmul.f32 %v1084, %v154
    %v1087 = vsub.f32 %v1077, %v1085
    %v1088 = vsub.f32 %v1078, %v1086
    %v1089 = vmul.f32 %v1087, %v1087
    %v1090 = vmul.f32 %v1088, %v1088
    %v1091 = vsel %vm141, %v1089, 0.0
    %1092 = vadd.xlane.f32.xlu0 %v1091
    %v1093 = vpop.xlane.xlu0 %1092
    %v1094 = vsel %vm141, %v1090, 0.0
    %1095 = vadd.xlane.f32.xlu0 %v1094
    %v1096 = vpop.xlane.xlu0 %1095
    %v1097 = vmul.f32 %v1093, %v154
    %v1098 = vmul.f32 %v1096, %v154
    %v1099 = vadd.f32 %v1097, 1e-12
    %v1100 = vadd.f32 %v1098, 1e-12
    %v1101 = vrsqrt.pop %v1099
    %v1102 = vmul.f32 %v1101, %v1099
    %v1103 = vmul.f32 %v1102, %v1101
    %v1104 = vmul.f32 0.5, %v1103
    %v1105 = vsub.f32 1.5, %v1104
    %v1106 = vmul.f32 %v1101, %v1105
    %vm1107 = vweird.f32 %v1099
    %vm1108 = vweird.f32 %v1101
    %vm1109 = vmor %vm1107, %vm1108
    %v1110 = vsel %vm1109, %v1101, %v1106
    %v1111 = vrsqrt.pop %v1100
    %v1112 = vmul.f32 %v1111, %v1100
    %v1113 = vmul.f32 %v1112, %v1111
    %v1114 = vmul.f32 0.5, %v1113
    %v1115 = vsub.f32 1.5, %v1114
    %v1116 = vmul.f32 %v1111, %v1115
    %vm1117 = vweird.f32 %v1100
    %vm1118 = vweird.f32 %v1111
    %vm1119 = vmor %vm1117, %vm1118
    %v1120 = vsel %vm1119, %v1111, %v1116
    %v1121 = vmul.f32 %v1087, %v1110
    %v1122 = vmul.f32 %v1088, %v1120
    %v1123 = vperm.slane %v747, 2
    %v1124 = vmul.f32 %v1121, %v1123
    %v1125 = vmul.f32 %v1122, %v1123
    %v1126 = vperm.slane %v747, 3
    %v1127 = vadd.f32 %v1124, %v1126
    %v1128 = vadd.f32 %v1125, %v1126
    %v1129 = vpack.c.bf16 %v1128, %v1127
    %s1130 = scalar_lea.vmem [#allocation6], 16
    %v1131 = vld [vmem:[%s1130] sm:$0xf]
    %v1132 = vld [vmem:[%s1130 + $0x4] sm:$0xf]
    %v1133 = vld [vmem:[%s1130 + $0x8] sm:$0xf]
    %v1134 = vld [vmem:[%s1130 + $0xc] sm:$0xf]
    %v1135 = vperm.slane %v747, 4
    %v1140 = vunpack.c.l.b16 %v1131
    %v1141 = vunpack.c.l.b16 %v1132
    %v1142 = vunpack.c.l.b16 %v1133
    %v1143 = vunpack.c.l.b16 %v1134
    %v1144 = vpack.c.b16 %v1141, %v1140
    %v1145 = vpack.c.b16 %v1143, %v1142
    %v1149 = vsel %vm141, %v1129, 0
    %1151 = vmatpush.bf16.msra.mxu0 0
    %1152 = vmatpush.bf16.msra.mxu0 0
    %1153 = vmatpush.bf16.msra.mxu0 0
    %1154 = vmatpush.bf16.msra.mxu0 0
    %1155 = vmatpush.bf16.msra.mxu0 0
    %1156 = vmatpush.bf16.msra.mxu0 0
    %1157 = vmatpush.bf16.msra.mxu0 %v1145
    %1158 = vmatpush.bf16.msra.mxu0 %v1144
    %1159 = vmatmul.bf16.gmra.mxu0 %v1149
    %v1160 = vpop.f32.mrf.mxu0
    %v1161 = vadd.f32 %v1135, %v1160
    %v1162 = vpop.f32.mrf.mxu0
    %v1163 = vadd.f32 %v1135, %v1162
    %1164 = vdwg.mxu0
    %v1165 = vmul.f32 %v1161, %v1161
    %v1166 = vmul.f32 %v1163, %v1163
    %v1167 = vmul.f32 %v1161, %v1165
    %v1168 = vmul.f32 %v1163, %v1166
    %v1169 = vmul.f32 %v1167, 0.044715
    %v1170 = vmul.f32 %v1168, 0.044715
    %v1171 = vadd.f32 %v1161, %v1169
    %v1172 = vadd.f32 %v1163, %v1170
    %v1173 = vmul.f32 %v1171, 0.7978846
    %v1174 = vmul.f32 %v1172, 0.7978846
    %v1175 = vtanh.pop %v1173
    %v1176 = vtanh.pop %v1174
    %v1177 = vadd.f32 %v1175, 1.0
    %v1178 = vadd.f32 %v1176, 1.0
    %v1179 = vmul.f32 %v1177, 0.5
    %v1180 = vmul.f32 %v1178, 0.5
    %v1181 = vmul.f32 %v1161, %v1179
    %v1182 = vmul.f32 %v1163, %v1180
    %v1183 = vpack.c.bf16 %v1182, %v1181
    %s1184 = scalar_lea.vmem %s6, 32
    %v1185 = vld [vmem:[%s1184] sm:$0xf]
    %v1186 = vld [vmem:[%s1184 + $0x4] sm:$0xf]
    %v1187 = vld [vmem:[%s1184 + $0x8] sm:$0xf]
    %v1188 = vld [vmem:[%s1184 + $0xc] sm:$0xf]
    %v1189 = vld [vmem:[%s1184 + $0x10] sm:$0xf]
    %v1190 = vld [vmem:[%s1184 + $0x14] sm:$0xf]
    %v1191 = vld [vmem:[%s1184 + $0x18] sm:$0xf]
    %v1192 = vld [vmem:[%s1184 + $0x1c] sm:$0xf]
    %v1193 = vperm.slane %v747, 5
    %v1202 = vunpack.c.l.b16 %v1185
    %v1203 = vunpack.c.l.b16 %v1186
    %v1204 = vunpack.c.l.b16 %v1187
    %v1205 = vunpack.c.l.b16 %v1188
    %v1206 = vunpack.c.l.b16 %v1189
    %v1207 = vunpack.c.l.b16 %v1190
    %v1208 = vunpack.c.l.b16 %v1191
    %v1209 = vunpack.c.l.b16 %v1192
    %v1210 = vpack.c.b16 %v1203, %v1202
    %v1211 = vpack.c.b16 %v1205, %v1204
    %v1212 = vpack.c.b16 %v1207, %v1206
    %v1213 = vpack.c.b16 %v1209, %v1208
    %v1219 = vsel %vm676, %v1183, 0
    %1221 = vmatpush.bf16.msra.mxu0 0
    %1222 = vmatpush.bf16.msra.mxu0 0
    %1223 = vmatpush.bf16.msra.mxu0 0
    %1224 = vmatpush.bf16.msra.mxu0 0
    %1225 = vmatpush.bf16.msra.mxu0 %v1213
    %1226 = vmatpush.bf16.msra.mxu0 %v1212
    %1227 = vmatpush.bf16.msra.mxu0 %v1211
    %1228 = vmatpush.bf16.msra.mxu0 %v1210
    %1229 = vmatmul.bf16.gmra.mxu0 %v1219
    %v1230 = vpop.f32.mrf.mxu0
    %v1231 = vadd.f32 %v1193, %v1230
    %v1232 = vpop.f32.mrf.mxu0
    %v1233 = vadd.f32 %v1193, %v1232
    %1234 = vdwg.mxu0
    %v1235 = vadd.f32 %v1127, %v1231
    %v1236 = vadd.f32 %v1128, %v1233
    %v1237 = vsel %vm141, %v1235, 0.0
    %1238 = vadd.xlane.f32.xlu0 %v1237
    %v1239 = vpop.xlane.xlu0 %1238
    %v1240 = vsel %vm141, %v1236, 0.0
    %1241 = vadd.xlane.f32.xlu0 %v1240
    %v1242 = vpop.xlane.xlu0 %1241
    %v1243 = vmul.f32 %v1239, %v154
    %v1244 = vmul.f32 %v1242, %v154
    %v1245 = vsub.f32 %v1235, %v1243
    %v1246 = vsub.f32 %v1236, %v1244
    %v1247 = vmul.f32 %v1245, %v1245
    %v1248 = vmul.f32 %v1246, %v1246
    %v1249 = vsel %vm141, %v1247, 0.0
    %1250 = vadd.xlane.f32.xlu0 %v1249
    %v1251 = vpop.xlane.xlu0 %1250
    %v1252 = vsel %vm141, %v1248, 0.0
    %1253 = vadd.xlane.f32.xlu0 %v1252
    %v1254 = vpop.xlane.xlu0 %1253
    %v1255 = vmul.f32 %v1251, %v154
    %v1256 = vmul.f32 %v1254, %v154
    %v1257 = vadd.f32 %v1255, 1e-12
    %v1258 = vadd.f32 %v1256, 1e-12
    %v1259 = vrsqrt.pop %v1257
    %v1260 = vmul.f32 %v1259, %v1257
    %v1261 = vmul.f32 %v1260, %v1259
    %v1262 = vmul.f32 0.5, %v1261
    %v1263 = vsub.f32 1.5, %v1262
    %v1264 = vmul.f32 %v1259, %v1263
    %vm1265 = vweird.f32 %v1257
    %vm1266 = vweird.f32 %v1259
    %vm1267 = vmor %vm1265, %vm1266
    %v1268 = vsel %vm1267, %v1259, %v1264
    %v1269 = vrsqrt.pop %v1258
    %v1270 = vmul.f32 %v1269, %v1258
    %v1271 = vmul.f32 %v1270, %v1269
    %v1272 = vmul.f32 0.5, %v1271
    %v1273 = vsub.f32 1.5, %v1272
    %v1274 = vmul.f32 %v1269, %v1273
    %vm1275 = vweird.f32 %v1258
    %vm1276 = vweird.f32 %v1269
    %vm1277 = vmor %vm1275, %vm1276
    %v1278 = vsel %vm1277, %v1269, %v1274
    %v1279 = vmul.f32 %v1245, %v1268
    %v1280 = vmul.f32 %v1246, %v1278
    %v1281 = vperm.slane %v747, 6
    %v1282 = vmul.f32 %v1279, %v1281
    %v1283 = vmul.f32 %v1280, %v1281
    %v1284 = vperm.slane %v747, 7
    %v1285 = vadd.f32 %v1282, %v1284
    %v1286 = vadd.f32 %v1283, %v1284
    %v1287 = vpack.c.bf16 %v1286, %v1285
    %v1288 = vld [vmem:[#allocation7] sm:$0xff]
    %v1289 = vld [vmem:[#allocation7 + $0x8] sm:$0xff]
    %v1290 = vld [vmem:[#allocation7 + $0x10] sm:$0xff]
    %v1291 = vld [vmem:[#allocation7 + $0x18] sm:$0xff]
    %v1292 = vld [vmem:[#allocation7 + $0x20] sm:$0xff]
    %v1293 = vld [vmem:[#allocation7 + $0x28] sm:$0xff]
    %v1294 = vld [vmem:[#allocation7 + $0x30] sm:$0xff]
    %v1295 = vld [vmem:[#allocation7 + $0x38] sm:$0xff]
    %v1296 = vld [vmem:[#allocation10] ss:$4 sm:$0xf]
    %v1298 = vperm.slane %v1296, 0
    %v1299 = vperm.slane %v1296, 1
    %v1300 = vperm.slane %v1296, 2
    %v1301 = vperm.slane %v1296, 3
    %v1314 = vunpack.c.l.b16 %v1288
    %v1315 = vunpack.c.h.b16 %v1288
    %v1316 = vunpack.c.l.b16 %v1289
    %v1317 = vunpack.c.h.b16 %v1289
    %v1318 = vunpack.c.l.b16 %v1290
    %v1319 = vunpack.c.h.b16 %v1290
    %v1320 = vunpack.c.l.b16 %v1291
    %v1321 = vunpack.c.h.b16 %v1291
    %v1322 = vunpack.c.l.b16 %v1292
    %v1323 = vunpack.c.h.b16 %v1292
    %v1324 = vunpack.c.l.b16 %v1293
    %v1325 = vunpack.c.h.b16 %v1293
    %v1326 = vunpack.c.l.b16 %v1294
    %v1327 = vunpack.c.h.b16 %v1294
    %v1328 = vunpack.c.l.b16 %v1295
    %v1329 = vunpack.c.h.b16 %v1295
    %v1330 = vpack.c.b16 %v1318, %v1314
    %v1331 = vpack.c.b16 %v1319, %v1315
    %v1332 = vpack.c.b16 %v1320, %v1316
    %v1333 = vpack.c.b16 %v1321, %v1317
    %v1334 = vpack.c.b16 %v1326, %v1322
    %v1335 = vpack.c.b16 %v1327, %v1323
    %v1336 = vpack.c.b16 %v1328, %v1324
    %v1337 = vpack.c.b16 %v1329, %v1325
    %v1347 = vsel %vm141, %v1287, 0
    %1349 = vmatpush.bf16.msra.mxu0 0
    %1350 = vmatpush.bf16.msra.mxu0 0
    %1351 = vmatpush.bf16.msra.mxu0 0
    %1352 = vmatpush.bf16.msra.mxu0 0
    %1353 = vmatpush.bf16.msra.mxu0 0
    %1354 = vmatpush.bf16.msra.mxu0 0
    %1355 = vmatpush.bf16.msra.mxu0 %v1334
    %1356 = vmatpush.bf16.msra.mxu0 %v1330
    %1357 = vmatmul.bf16.gmra.mxu0 %v1347
    %v1358 = vpop.f32.mrf.mxu0
    %v1359 = vadd.f32 %v1298, %v1358
    %v1360 = vpop.f32.mrf.mxu0
    %v1361 = vadd.f32 %v1298, %v1360
    %1362 = vdwg.mxu0
    %1363 = vmatpush.bf16.msra.mxu0 0
    %1364 = vmatpush.bf16.msra.mxu0 0
    %1365 = vmatpush.bf16.msra.mxu0 0
    %1366 = vmatpush.bf16.msra.mxu0 0
    %1367 = vmatpush.bf16.msra.mxu0 0
    %1368 = vmatpush.bf16.msra.mxu0 0
    %1369 = vmatpush.bf16.msra.mxu0 %v1335
    %1370 = vmatpush.bf16.msra.mxu0 %v1331
    %1371 = vmatmul.bf16.gmra.mxu0 %v1347
    %v1372 = vpop.f32.mrf.mxu0
    %v1373 = vadd.f32 %v1299, %v1372
    %v1374 = vpop.f32.mrf.mxu0
    %v1375 = vadd.f32 %v1299, %v1374
    %1376 = vdwg.mxu0
    %1377 = vmatpush.bf16.msra.mxu0 0
    %1378 = vmatpush.bf16.msra.mxu0 0
    %1379 = vmatpush.bf16.msra.mxu0 0
    %1380 = vmatpush.bf16.msra.mxu0 0
    %1381 = vmatpush.bf16.msra.mxu0 0
    %1382 = vmatpush.bf16.msra.mxu0 0
    %1383 = vmatpush.bf16.msra.mxu0 %v1336
    %1384 = vmatpush.bf16.msra.mxu0 %v1332
    %1385 = vmatmul.bf16.gmra.mxu0 %v1347
    %v1386 = vpop.f32.mrf.mxu0
    %v1387 = vadd.f32 %v1300, %v1386
    %v1388 = vpop.f32.mrf.mxu0
    %v1389 = vadd.f32 %v1300, %v1388
    %1390 = vdwg.mxu0
    %1391 = vmatpush.bf16.msra.mxu0 0
    %1392 = vmatpush.bf16.msra.mxu0 0
    %1393 = vmatpush.bf16.msra.mxu0 0
    %1394 = vmatpush.bf16.msra.mxu0 0
    %1395 = vmatpush.bf16.msra.mxu0 0
    %1396 = vmatpush.bf16.msra.mxu0 0
    %1397 = vmatpush.bf16.msra.mxu0 %v1337
    %1398 = vmatpush.bf16.msra.mxu0 %v1333
    %1399 = vmatmul.bf16.gmra.mxu0 %v1347
    %v1400 = vpop.f32.mrf.mxu0
    %v1401 = vadd.f32 %v1301, %v1400
    %v1402 = vpop.f32.mrf.mxu0
    %v1403 = vadd.f32 %v1301, %v1402
    %1404 = vdwg.mxu0
    %v1405 = vmax.f32 %v1359, 0.0
    %v1406 = vmax.f32 %v1373, 0.0
    %v1407 = vmax.f32 %v1387, 0.0
    %v1408 = vmax.f32 %v1401, 0.0
    %v1409 = vmax.f32 %v1361, 0.0
    %v1410 = vmax.f32 %v1375, 0.0
    %v1411 = vmax.f32 %v1389, 0.0
    %v1412 = vmax.f32 %v1403, 0.0
    %v1413 = vpack.c.bf16 %v1409, %v1405
    %v1414 = vpack.c.bf16 %v1410, %v1406
    %v1415 = vpack.c.bf16 %v1411, %v1407
    %v1416 = vpack.c.bf16 %v1412, %v1408
    %v1417 = vld [vmem:[%s9] sm:$0xff]
    %v1418 = vld [vmem:[%s9 + $0x8] sm:$0xff]
    %v1419 = vld [vmem:[%s9 + $0x10] sm:$0xff]
    %v1420 = vld [vmem:[%s9 + $0x18] sm:$0xff]
    %v1421 = vld [vmem:[%s9 + $0x20] sm:$0xff]
    %v1422 = vld [vmem:[%s9 + $0x28] sm:$0xff]
    %v1423 = vld [vmem:[%s9 + $0x30] sm:$0xff]
    %v1424 = vld [vmem:[%s9 + $0x38] sm:$0xff]
    %v1425 = vld [vmem:[%s9 + $0x40] sm:$0xff]
    %v1426 = vld [vmem:[%s9 + $0x48] sm:$0xff]
    %v1427 = vld [vmem:[%s9 + $0x50] sm:$0xff]
    %v1428 = vld [vmem:[%s9 + $0x58] sm:$0xff]
    %v1429 = vld [vmem:[%s9 + $0x60] sm:$0xff]
    %v1430 = vld [vmem:[%s9 + $0x68] sm:$0xff]
    %v1431 = vld [vmem:[%s9 + $0x70] sm:$0xff]
    %v1432 = vld [vmem:[%s9 + $0x78] sm:$0xff]
    %v1433 = vld [vmem:[%s9 + $0x80] sm:$0xff]
    %v1434 = vld [vmem:[%s9 + $0x88] sm:$0xff]
    %v1435 = vld [vmem:[%s9 + $0x90] sm:$0xff]
    %v1436 = vld [vmem:[%s9 + $0x98] sm:$0xff]
    %v1437 = vld [vmem:[%s9 + $0xa0] sm:$0xff]
    %v1438 = vld [vmem:[%s9 + $0xa8] sm:$0xff]
    %v1439 = vld [vmem:[%s9 + $0xb0] sm:$0xff]
    %v1440 = vld [vmem:[%s9 + $0xb8] sm:$0xff]
    %v1441 = vld [vmem:[%s9 + $0xc0] sm:$0xff]
    %v1442 = vld [vmem:[%s9 + $0xc8] sm:$0xff]
    %v1443 = vld [vmem:[%s9 + $0xd0] sm:$0xff]
    %v1444 = vld [vmem:[%s9 + $0xd8] sm:$0xff]
    %v1445 = vld [vmem:[%s9 + $0xe0] sm:$0xff]
    %v1446 = vld [vmem:[%s9 + $0xe8] sm:$0xff]
    %v1447 = vld [vmem:[%s9 + $0xf0] sm:$0xff]
    %v1448 = vld [vmem:[%s9 + $0xf8] sm:$0xff]
    %v1449 = vld [vmem:[%s9 + $0x100] sm:$0xff]
    %v1450 = vld [vmem:[%s9 + $0x108] sm:$0xff]
    %v1451 = vld [vmem:[%s9 + $0x110] sm:$0xff]
    %v1452 = vld [vmem:[%s9 + $0x118] sm:$0xff]
    %v1453 = vld [vmem:[%s9 + $0x120] sm:$0xff]
    %v1454 = vld [vmem:[%s9 + $0x128] sm:$0xff]
    %v1455 = vld [vmem:[%s9 + $0x130] sm:$0xff]
    %v1456 = vld [vmem:[%s9 + $0x138] sm:$0xff]
    %v1457 = vld [vmem:[%s9 + $0x140] sm:$0xff]
    %v1458 = vld [vmem:[%s9 + $0x148] sm:$0xff]
    %v1459 = vld [vmem:[%s9 + $0x150] sm:$0xff]
    %v1460 = vld [vmem:[%s9 + $0x158] sm:$0xff]
    %v1461 = vld [vmem:[%s9 + $0x160] sm:$0xff]
    %v1462 = vld [vmem:[%s9 + $0x168] sm:$0xff]
    %v1463 = vld [vmem:[%s9 + $0x170] sm:$0xff]
    %v1464 = vld [vmem:[%s9 + $0x178] sm:$0xff]
    %v1465 = vld [vmem:[%s9 + $0x180] sm:$0xff]
    %v1466 = vld [vmem:[%s9 + $0x188] sm:$0xff]
    %v1467 = vld [vmem:[%s9 + $0x190] sm:$0xff]
    %v1468 = vld [vmem:[%s9 + $0x198] sm:$0xff]
    %v1469 = vld [vmem:[%s9 + $0x1a0] sm:$0xff]
    %v1470 = vld [vmem:[%s9 + $0x1a8] sm:$0xff]
    %v1471 = vld [vmem:[%s9 + $0x1b0] sm:$0xff]
    %v1472 = vld [vmem:[%s9 + $0x1b8] sm:$0xff]
    %v1473 = vld [vmem:[%s9 + $0x1c0] sm:$0xff]
    %v1474 = vld [vmem:[%s9 + $0x1c8] sm:$0xff]
    %v1475 = vld [vmem:[%s9 + $0x1d0] sm:$0xff]
    %v1476 = vld [vmem:[%s9 + $0x1d8] sm:$0xff]
    %v1477 = vld [vmem:[%s9 + $0x1e0] sm:$0xff]
    %v1478 = vld [vmem:[%s9 + $0x1e8] sm:$0xff]
    %v1479 = vld [vmem:[%s9 + $0x1f0] sm:$0xff]
    %v1480 = vld [vmem:[%s9 + $0x1f8] sm:$0xff]
    %s1481 = scalar_lea.vmem [#allocation10], 1
    %v1482 = vld [vmem:[%s1481] ss:$4 sm:$0x3]
    %v1484 = vperm.slane %v1482, 0
    %v1485 = vperm.slane %v1482, 1
    %v1552 = vunpack.c.l.b16 %v1417
    %v1553 = vunpack.c.h.b16 %v1417
    %v1554 = vunpack.c.l.b16 %v1418
    %v1555 = vunpack.c.h.b16 %v1418
    %v1556 = vunpack.c.l.b16 %v1419
    %v1557 = vunpack.c.h.b16 %v1419
    %v1558 = vunpack.c.l.b16 %v1420
    %v1559 = vunpack.c.h.b16 %v1420
    %v1560 = vunpack.c.l.b16 %v1421
    %v1561 = vunpack.c.h.b16 %v1421
    %v1562 = vunpack.c.l.b16 %v1422
    %v1563 = vunpack.c.h.b16 %v1422
    %v1564 = vunpack.c.l.b16 %v1423
    %v1565 = vunpack.c.h.b16 %v1423
    %v1566 = vunpack.c.l.b16 %v1424
    %v1567 = vunpack.c.h.b16 %v1424
    %v1568 = vunpack.c.l.b16 %v1425
    %v1569 = vunpack.c.h.b16 %v1425
    %v1570 = vunpack.c.l.b16 %v1426
    %v1571 = vunpack.c.h.b16 %v1426
    %v1572 = vunpack.c.l.b16 %v1427
    %v1573 = vunpack.c.h.b16 %v1427
    %v1574 = vunpack.c.l.b16 %v1428
    %v1575 = vunpack.c.h.b16 %v1428
    %v1576 = vunpack.c.l.b16 %v1429
    %v1577 = vunpack.c.h.b16 %v1429
    %v1578 = vunpack.c.l.b16 %v1430
    %v1579 = vunpack.c.h.b16 %v1430
    %v1580 = vunpack.c.l.b16 %v1431
    %v1581 = vunpack.c.h.b16 %v1431
    %v1582 = vunpack.c.l.b16 %v1432
    %v1583 = vunpack.c.h.b16 %v1432
    %v1584 = vunpack.c.l.b16 %v1433
    %v1585 = vunpack.c.h.b16 %v1433
    %v1586 = vunpack.c.l.b16 %v1434
    %v1587 = vunpack.c.h.b16 %v1434
    %v1588 = vunpack.c.l.b16 %v1435
    %v1589 = vunpack.c.h.b16 %v1435
    %v1590 = vunpack.c.l.b16 %v1436
    %v1591 = vunpack.c.h.b16 %v1436
    %v1592 = vunpack.c.l.b16 %v1437
    %v1593 = vunpack.c.h.b16 %v1437
    %v1594 = vunpack.c.l.b16 %v1438
    %v1595 = vunpack.c.h.b16 %v1438
    %v1596 = vunpack.c.l.b16 %v1439
    %v1597 = vunpack.c.h.b16 %v1439
    %v1598 = vunpack.c.l.b16 %v1440
    %v1599 = vunpack.c.h.b16 %v1440
    %v1600 = vunpack.c.l.b16 %v1441
    %v1601 = vunpack.c.h.b16 %v1441
    %v1602 = vunpack.c.l.b16 %v1442
    %v1603 = vunpack.c.h.b16 %v1442
    %v1604 = vunpack.c.l.b16 %v1443
    %v1605 = vunpack.c.h.b16 %v1443
    %v1606 = vunpack.c.l.b16 %v1444
    %v1607 = vunpack.c.h.b16 %v1444
    %v1608 = vunpack.c.l.b16 %v1445
    %v1609 = vunpack.c.h.b16 %v1445
    %v1610 = vunpack.c.l.b16 %v1446
    %v1611 = vunpack.c.h.b16 %v1446
    %v1612 = vunpack.c.l.b16 %v1447
    %v1613 = vunpack.c.h.b16 %v1447
    %v1614 = vunpack.c.l.b16 %v1448
    %v1615 = vunpack.c.h.b16 %v1448
    %v1616 = vunpack.c.l.b16 %v1449
    %v1617 = vunpack.c.h.b16 %v1449
    %v1618 = vunpack.c.l.b16 %v1450
    %v1619 = vunpack.c.h.b16 %v1450
    %v1620 = vunpack.c.l.b16 %v1451
    %v1621 = vunpack.c.h.b16 %v1451
    %v1622 = vunpack.c.l.b16 %v1452
    %v1623 = vunpack.c.h.b16 %v1452
    %v1624 = vunpack.c.l.b16 %v1453
    %v1625 = vunpack.c.h.b16 %v1453
    %v1626 = vunpack.c.l.b16 %v1454
    %v1627 = vunpack.c.h.b16 %v1454
    %v1628 = vunpack.c.l.b16 %v1455
    %v1629 = vunpack.c.h.b16 %v1455
    %v1630 = vunpack.c.l.b16 %v1456
    %v1631 = vunpack.c.h.b16 %v1456
    %v1632 = vunpack.c.l.b16 %v1457
    %v1633 = vunpack.c.h.b16 %v1457
    %v1634 = vunpack.c.l.b16 %v1458
    %v1635 = vunpack.c.h.b16 %v1458
    %v1636 = vunpack.c.l.b16 %v1459
    %v1637 = vunpack.c.h.b16 %v1459
    %v1638 = vunpack.c.l.b16 %v1460
    %v1639 = vunpack.c.h.b16 %v1460
    %v1640 = vunpack.c.l.b16 %v1461
    %v1641 = vunpack.c.h.b16 %v1461
    %v1642 = vunpack.c.l.b16 %v1462
    %v1643 = vunpack.c.h.b16 %v1462
    %v1644 = vunpack.c.l.b16 %v1463
    %v1645 = vunpack.c.h.b16 %v1463
    %v1646 = vunpack.c.l.b16 %v1464
    %v1647 = vunpack.c.h.b16 %v1464
    %v1648 = vunpack.c.l.b16 %v1465
    %v1649 = vunpack.c.h.b16 %v1465
    %v1650 = vunpack.c.l.b16 %v1466
    %v1651 = vunpack.c.h.b16 %v1466
    %v1652 = vunpack.c.l.b16 %v1467
    %v1653 = vunpack.c.h.b16 %v1467
    %v1654 = vunpack.c.l.b16 %v1468
    %v1655 = vunpack.c.h.b16 %v1468
    %v1656 = vunpack.c.l.b16 %v1469
    %v1657 = vunpack.c.h.b16 %v1469
    %v1658 = vunpack.c.l.b16 %v1470
    %v1659 = vunpack.c.h.b16 %v1470
    %v1660 = vunpack.c.l.b16 %v1471
    %v1661 = vunpack.c.h.b16 %v1471
    %v1662 = vunpack.c.l.b16 %v1472
    %v1663 = vunpack.c.h.b16 %v1472
    %v1664 = vunpack.c.l.b16 %v1473
    %v1665 = vunpack.c.h.b16 %v1473
    %v1666 = vunpack.c.l.b16 %v1474
    %v1667 = vunpack.c.h.b16 %v1474
    %v1668 = vunpack.c.l.b16 %v1475
    %v1669 = vunpack.c.h.b16 %v1475
    %v1670 = vunpack.c.l.b16 %v1476
    %v1671 = vunpack.c.h.b16 %v1476
    %v1672 = vunpack.c.l.b16 %v1477
    %v1673 = vunpack.c.h.b16 %v1477
    %v1674 = vunpack.c.l.b16 %v1478
    %v1675 = vunpack.c.h.b16 %v1478
    %v1676 = vunpack.c.l.b16 %v1479
    %v1677 = vunpack.c.h.b16 %v1479
    %v1678 = vunpack.c.l.b16 %v1480
    %v1679 = vunpack.c.h.b16 %v1480
    %v1680 = vpack.c.b16 %v1554, %v1552
    %v1681 = vpack.c.b16 %v1555, %v1553
    %v1682 = vpack.c.b16 %v1558, %v1556
    %v1683 = vpack.c.b16 %v1559, %v1557
    %v1684 = vpack.c.b16 %v1562, %v1560
    %v1685 = vpack.c.b16 %v1563, %v1561
    %v1686 = vpack.c.b16 %v1566, %v1564
    %v1687 = vpack.c.b16 %v1567, %v1565
    %v1688 = vpack.c.b16 %v1570, %v1568
    %v1689 = vpack.c.b16 %v1571, %v1569
    %v1690 = vpack.c.b16 %v1574, %v1572
    %v1691 = vpack.c.b16 %v1575, %v1573
    %v1692 = vpack.c.b16 %v1578, %v1576
    %v1693 = vpack.c.b16 %v1579, %v1577
    %v1694 = vpack.c.b16 %v1582, %v1580
    %v1695 = vpack.c.b16 %v1583, %v1581
    %v1696 = vpack.c.b16 %v1586, %v1584
    %v1697 = vpack.c.b16 %v1587, %v1585
    %v1698 = vpack.c.b16 %v1590, %v1588
    %v1699 = vpack.c.b16 %v1591, %v1589
    %v1700 = vpack.c.b16 %v1594, %v1592
    %v1701 = vpack.c.b16 %v1595, %v1593
    %v1702 = vpack.c.b16 %v1598, %v1596
    %v1703 = vpack.c.b16 %v1599, %v1597
    %v1704 = vpack.c.b16 %v1602, %v1600
    %v1705 = vpack.c.b16 %v1603, %v1601
    %v1706 = vpack.c.b16 %v1606, %v1604
    %v1707 = vpack.c.b16 %v1607, %v1605
    %v1708 = vpack.c.b16 %v1610, %v1608
    %v1709 = vpack.c.b16 %v1611, %v1609
    %v1710 = vpack.c.b16 %v1614, %v1612
    %v1711 = vpack.c.b16 %v1615, %v1613
    %v1712 = vpack.c.b16 %v1618, %v1616
    %v1713 = vpack.c.b16 %v1619, %v1617
    %v1714 = vpack.c.b16 %v1622, %v1620
    %v1715 = vpack.c.b16 %v1623, %v1621
    %v1716 = vpack.c.b16 %v1626, %v1624
    %v1717 = vpack.c.b16 %v1627, %v1625
    %v1718 = vpack.c.b16 %v1630, %v1628
    %v1719 = vpack.c.b16 %v1631, %v1629
    %v1720 = vpack.c.b16 %v1634, %v1632
    %v1721 = vpack.c.b16 %v1635, %v1633
    %v1722 = vpack.c.b16 %v1638, %v1636
    %v1723 = vpack.c.b16 %v1639, %v1637
    %v1724 = vpack.c.b16 %v1642, %v1640
    %v1725 = vpack.c.b16 %v1643, %v1641
    %v1726 = vpack.c.b16 %v1646, %v1644
    %v1727 = vpack.c.b16 %v1647, %v1645
    %v1728 = vpack.c.b16 %v1650, %v1648
    %v1729 = vpack.c.b16 %v1651, %v1649
    %v1730 = vpack.c.b16 %v1654, %v1652
    %v1731 = vpack.c.b16 %v1655, %v1653
    %v1732 = vpack.c.b16 %v1658, %v1656
    %v1733 = vpack.c.b16 %v1659, %v1657
    %v1734 = vpack.c.b16 %v1662, %v1660
    %v1735 = vpack.c.b16 %v1663, %v1661
    %v1736 = vpack.c.b16 %v1666, %v1664
    %v1737 = vpack.c.b16 %v1667, %v1665
    %v1738 = vpack.c.b16 %v1670, %v1668
    %v1739 = vpack.c.b16 %v1671, %v1669
    %v1740 = vpack.c.b16 %v1674, %v1672
    %v1741 = vpack.c.b16 %v1675, %v1673
    %v1742 = vpack.c.b16 %v1678, %v1676
    %v1743 = vpack.c.b16 %v1679, %v1677
    %1808 = vmatpush.bf16.msra.mxu0 %v1694
    %1809 = vmatpush.bf16.msra.mxu0 %v1692
    %1810 = vmatpush.bf16.msra.mxu0 %v1690
    %1811 = vmatpush.bf16.msra.mxu0 %v1688
    %1812 = vmatpush.bf16.msra.mxu0 %v1686
    %1813 = vmatpush.bf16.msra.mxu0 %v1684
    %1814 = vmatpush.bf16.msra.mxu0 %v1682
    %1815 = vmatpush.bf16.msra.mxu0 %v1680
    %1816 = vmatmul.bf16.gmra.mxu0 %v1413
    %v1817 = vpop.f32.mrf.mxu0
    %v1818 = vadd.f32 %v1484, %v1817
    %v1819 = vpop.f32.mrf.mxu0
    %v1820 = vadd.f32 %v1484, %v1819
    %1821 = vdwg.mxu0
    %1822 = vmatpush.bf16.msra.mxu0 %v1710
    %1823 = vmatpush.bf16.msra.mxu0 %v1708
    %1824 = vmatpush.bf16.msra.mxu0 %v1706
    %1825 = vmatpush.bf16.msra.mxu0 %v1704
    %1826 = vmatpush.bf16.msra.mxu0 %v1702
    %1827 = vmatpush.bf16.msra.mxu0 %v1700
    %1828 = vmatpush.bf16.msra.mxu0 %v1698
    %1829 = vmatpush.bf16.msra.mxu0 %v1696
    %1830 = vmatmul.bf16.gmra.mxu0 %v1414
    %v1831 = vpop.f32.mrf.mxu0
    %v1832 = vadd.f32 %v1818, %v1831
    %v1833 = vpop.f32.mrf.mxu0
    %v1834 = vadd.f32 %v1820, %v1833
    %1835 = vdwg.mxu0
    %1836 = vmatpush.bf16.msra.mxu0 %v1726
    %1837 = vmatpush.bf16.msra.mxu0 %v1724
    %1838 = vmatpush.bf16.msra.mxu0 %v1722
    %1839 = vmatpush.bf16.msra.mxu0 %v1720
    %1840 = vmatpush.bf16.msra.mxu0 %v1718
    %1841 = vmatpush.bf16.msra.mxu0 %v1716
    %1842 = vmatpush.bf16.msra.mxu0 %v1714
    %1843 = vmatpush.bf16.msra.mxu0 %v1712
    %1844 = vmatmul.bf16.gmra.mxu0 %v1415
    %v1845 = vpop.f32.mrf.mxu0
    %v1846 = vadd.f32 %v1832, %v1845
    %v1847 = vpop.f32.mrf.mxu0
    %v1848 = vadd.f32 %v1834, %v1847
    %1849 = vdwg.mxu0
    %1850 = vmatpush.bf16.msra.mxu0 %v1742
    %1851 = vmatpush.bf16.msra.mxu0 %v1740
    %1852 = vmatpush.bf16.msra.mxu0 %v1738
    %1853 = vmatpush.bf16.msra.mxu0 %v1736
    %1854 = vmatpush.bf16.msra.mxu0 %v1734
    %1855 = vmatpush.bf16.msra.mxu0 %v1732
    %1856 = vmatpush.bf16.msra.mxu0 %v1730
    %1857 = vmatpush.bf16.msra.mxu0 %v1728
    %1858 = vmatmul.bf16.gmra.mxu0 %v1416
    %v1859 = vpop.f32.mrf.mxu0
    %v1860 = vadd.f32 %v1846, %v1859
    %v1861 = vpop.f32.mrf.mxu0
    %v1862 = vadd.f32 %v1848, %v1861
    %1863 = vdwg.mxu0
    %1864 = vmatpush.bf16.msra.mxu0 %v1695
    %1865 = vmatpush.bf16.msra.mxu0 %v1693
    %1866 = vmatpush.bf16.msra.mxu0 %v1691
    %1867 = vmatpush.bf16.msra.mxu0 %v1689
    %1868 = vmatpush.bf16.msra.mxu0 %v1687
    %1869 = vmatpush.bf16.msra.mxu0 %v1685
    %1870 = vmatpush.bf16.msra.mxu0 %v1683
    %1871 = vmatpush.bf16.msra.mxu0 %v1681
    %1872 = vmatmul.bf16.gmra.mxu0 %v1413
    %v1873 = vpop.f32.mrf.mxu0
    %v1874 = vadd.f32 %v1485, %v1873
    %v1875 = vpop.f32.mrf.mxu0
    %v1876 = vadd.f32 %v1485, %v1875
    %1877 = vdwg.mxu0
    %1878 = vmatpush.bf16.msra.mxu0 %v1711
    %1879 = vmatpush.bf16.msra.mxu0 %v1709
    %1880 = vmatpush.bf16.msra.mxu0 %v1707
    %1881 = vmatpush.bf16.msra.mxu0 %v1705
    %1882 = vmatpush.bf16.msra.mxu0 %v1703
    %1883 = vmatpush.bf16.msra.mxu0 %v1701
    %1884 = vmatpush.bf16.msra.mxu0 %v1699
    %1885 = vmatpush.bf16.msra.mxu0 %v1697
    %1886 = vmatmul.bf16.gmra.mxu0 %v1414
    %v1887 = vpop.f32.mrf.mxu0
    %v1888 = vadd.f32 %v1874, %v1887
    %v1889 = vpop.f32.mrf.mxu0
    %v1890 = vadd.f32 %v1876, %v1889
    %1891 = vdwg.mxu0
    %1892 = vmatpush.bf16.msra.mxu0 %v1727
    %1893 = vmatpush.bf16.msra.mxu0 %v1725
    %1894 = vmatpush.bf16.msra.mxu0 %v1723
    %1895 = vmatpush.bf16.msra.mxu0 %v1721
    %1896 = vmatpush.bf16.msra.mxu0 %v1719
    %1897 = vmatpush.bf16.msra.mxu0 %v1717
    %1898 = vmatpush.bf16.msra.mxu0 %v1715
    %1899 = vmatpush.bf16.msra.mxu0 %v1713
    %1900 = vmatmul.bf16.gmra.mxu0 %v1415
    %v1901 = vpop.f32.mrf.mxu0
    %v1902 = vadd.f32 %v1888, %v1901
    %v1903 = vpop.f32.mrf.mxu0
    %v1904 = vadd.f32 %v1890, %v1903
    %1905 = vdwg.mxu0
    %1906 = vmatpush.bf16.msra.mxu0 %v1743
    %1907 = vmatpush.bf16.msra.mxu0 %v1741
    %1908 = vmatpush.bf16.msra.mxu0 %v1739
    %1909 = vmatpush.bf16.msra.mxu0 %v1737
    %1910 = vmatpush.bf16.msra.mxu0 %v1735
    %1911 = vmatpush.bf16.msra.mxu0 %v1733
    %1912 = vmatpush.bf16.msra.mxu0 %v1731
    %1913 = vmatpush.bf16.msra.mxu0 %v1729
    %1914 = vmatmul.bf16.gmra.mxu0 %v1416
    %v1915 = vpop.f32.mrf.mxu0
    %v1916 = vadd.f32 %v1902, %v1915
    %v1917 = vpop.f32.mrf.mxu0
    %v1918 = vadd.f32 %v1904, %v1917
    %1919 = vdwg.mxu0
    %v1920 = vmax.f32 %v1860, 0.0
    %v1921 = vmax.f32 %v1916, 0.0
    %v1922 = vmax.f32 %v1862, 0.0
    %v1923 = vmax.f32 %v1918, 0.0
    %v1924 = vpack.c.bf16 %v1922, %v1920
    %v1925 = vpack.c.bf16 %v1923, %v1921
    %v1926 = vld [vmem:[%s10] sm:$0xf]
    %v1927 = vld [vmem:[%s10 + $0x4] sm:$0xf]
    %v1928 = vld [vmem:[%s10 + $0x8] sm:$0xf]
    %v1929 = vld [vmem:[%s10 + $0xc] sm:$0xf]
    %v1930 = vld [vmem:[%s10 + $0x10] sm:$0xf]
    %v1931 = vld [vmem:[%s10 + $0x14] sm:$0xf]
    %v1932 = vld [vmem:[%s10 + $0x18] sm:$0xf]
    %v1933 = vld [vmem:[%s10 + $0x1c] sm:$0xf]
    %v1934 = vld [vmem:[%s10 + $0x20] sm:$0xf]
    %v1935 = vld [vmem:[%s10 + $0x24] sm:$0xf]
    %v1936 = vld [vmem:[%s10 + $0x28] sm:$0xf]
    %v1937 = vld [vmem:[%s10 + $0x2c] sm:$0xf]
    %v1938 = vld [vmem:[%s10 + $0x30] sm:$0xf]
    %v1939 = vld [vmem:[%s10 + $0x34] sm:$0xf]
    %v1940 = vld [vmem:[%s10 + $0x38] sm:$0xf]
    %v1941 = vld [vmem:[%s10 + $0x3c] sm:$0xf]
    %v1942 = vld [vmem:[%s10 + $0x40] sm:$0xf]
    %v1943 = vld [vmem:[%s10 + $0x44] sm:$0xf]
    %v1944 = vld [vmem:[%s10 + $0x48] sm:$0xf]
    %v1945 = vld [vmem:[%s10 + $0x4c] sm:$0xf]
    %v1946 = vld [vmem:[%s10 + $0x50] sm:$0xf]
    %v1947 = vld [vmem:[%s10 + $0x54] sm:$0xf]
    %v1948 = vld [vmem:[%s10 + $0x58] sm:$0xf]
    %v1949 = vld [vmem:[%s10 + $0x5c] sm:$0xf]
    %v1950 = vld [vmem:[%s10 + $0x60] sm:$0xf]
    %v1951 = vld [vmem:[%s10 + $0x64] sm:$0xf]
    %v1952 = vld [vmem:[%s10 + $0x68] sm:$0xf]
    %v1953 = vld [vmem:[%s10 + $0x6c] sm:$0xf]
    %v1954 = vld [vmem:[%s10 + $0x70] sm:$0xf]
    %v1955 = vld [vmem:[%s10 + $0x74] sm:$0xf]
    %v1956 = vld [vmem:[%s10 + $0x78] sm:$0xf]
    %v1957 = vld [vmem:[%s10 + $0x7c] sm:$0xf]
    %v1958 = vld [vmem:[#allocation10 + $0x2] sm:$0x1]
    %v1959 = vperm.slane %v1958, 0
    %v1992 = vunpack.c.l.b16 %v1926
    %v1993 = vunpack.c.l.b16 %v1927
    %v1994 = vunpack.c.l.b16 %v1928
    %v1995 = vunpack.c.l.b16 %v1929
    %v1996 = vunpack.c.l.b16 %v1930
    %v1997 = vunpack.c.l.b16 %v1931
    %v1998 = vunpack.c.l.b16 %v1932
    %v1999 = vunpack.c.l.b16 %v1933
    %v2000 = vunpack.c.l.b16 %v1934
    %v2001 = vunpack.c.l.b16 %v1935
    %v2002 = vunpack.c.l.b16 %v1936
    %v2003 = vunpack.c.l.b16 %v1937
    %v2004 = vunpack.c.l.b16 %v1938
    %v2005 = vunpack.c.l.b16 %v1939
    %v2006 = vunpack.c.l.b16 %v1940
    %v2007 = vunpack.c.l.b16 %v1941
    %v2008 = vunpack.c.l.b16 %v1942
    %v2009 = vunpack.c.l.b16 %v1943
    %v2010 = vunpack.c.l.b16 %v1944
    %v2011 = vunpack.c.l.b16 %v1945
    %v2012 = vunpack.c.l.b16 %v1946
    %v2013 = vunpack.c.l.b16 %v1947
    %v2014 = vunpack.c.l.b16 %v1948
    %v2015 = vunpack.c.l.b16 %v1949
    %v2016 = vunpack.c.l.b16 %v1950
    %v2017 = vunpack.c.l.b16 %v1951
    %v2018 = vunpack.c.l.b16 %v1952
    %v2019 = vunpack.c.l.b16 %v1953
    %v2020 = vunpack.c.l.b16 %v1954
    %v2021 = vunpack.c.l.b16 %v1955
    %v2022 = vunpack.c.l.b16 %v1956
    %v2023 = vunpack.c.l.b16 %v1957
    %v2024 = vpack.c.b16 %v1993, %v1992
    %v2025 = vpack.c.b16 %v1995, %v1994
    %v2026 = vpack.c.b16 %v1997, %v1996
    %v2027 = vpack.c.b16 %v1999, %v1998
    %v2028 = vpack.c.b16 %v2001, %v2000
    %v2029 = vpack.c.b16 %v2003, %v2002
    %v2030 = vpack.c.b16 %v2005, %v2004
    %v2031 = vpack.c.b16 %v2007, %v2006
    %v2032 = vpack.c.b16 %v2009, %v2008
    %v2033 = vpack.c.b16 %v2011, %v2010
    %v2034 = vpack.c.b16 %v2013, %v2012
    %v2035 = vpack.c.b16 %v2015, %v2014
    %v2036 = vpack.c.b16 %v2017, %v2016
    %v2037 = vpack.c.b16 %v2019, %v2018
    %v2038 = vpack.c.b16 %v2021, %v2020
    %v2039 = vpack.c.b16 %v2023, %v2022
    %2056 = vmatpush.bf16.msra.mxu0 %v2031
    %2057 = vmatpush.bf16.msra.mxu0 %v2030
    %2058 = vmatpush.bf16.msra.mxu0 %v2029
    %2059 = vmatpush.bf16.msra.mxu0 %v2028
    %2060 = vmatpush.bf16.msra.mxu0 %v2027
    %2061 = vmatpush.bf16.msra.mxu0 %v2026
    %2062 = vmatpush.bf16.msra.mxu0 %v2025
    %2063 = vmatpush.bf16.msra.mxu0 %v2024
    %2064 = vmatmul.bf16.gmra.mxu0 %v1924
    %v2065 = vpop.f32.mrf.mxu0
    %v2066 = vadd.f32 %v1959, %v2065
    %v2067 = vpop.f32.mrf.mxu0
    %v2068 = vadd.f32 %v1959, %v2067
    %2069 = vdwg.mxu0
    %2070 = vmatpush.bf16.msra.mxu0 %v2039
    %2071 = vmatpush.bf16.msra.mxu0 %v2038
    %2072 = vmatpush.bf16.msra.mxu0 %v2037
    %2073 = vmatpush.bf16.msra.mxu0 %v2036
    %2074 = vmatpush.bf16.msra.mxu0 %v2035
    %2075 = vmatpush.bf16.msra.mxu0 %v2034
    %2076 = vmatpush.bf16.msra.mxu0 %v2033
    %2077 = vmatpush.bf16.msra.mxu0 %v2032
    %2078 = vmatmul.bf16.gmra.mxu0 %v1925
    %v2079 = vpop.f32.mrf.mxu0
    %v2080 = vadd.f32 %v2066, %v2079
    %v2081 = vpop.f32.mrf.mxu0
    %v2082 = vadd.f32 %v2068, %v2081
    %2083 = vdwg.mxu0
    %v2084 = vmax.f32 %v2080, 0.0
    %v2085 = vmax.f32 %v2082, 0.0
    %v2086 = vpack.c.bf16 %v2085, %v2084
    %v2087 = vld [vmem:[#allocation9] sm:$0xf]
    %v2088 = vld [vmem:[#allocation9 + $0x4] sm:$0xf]
    %v2089 = vld [vmem:[#allocation9 + $0x8] sm:$0xf]
    %v2090 = vld [vmem:[#allocation9 + $0xc] sm:$0xf]
    %v2091 = vld [vmem:[#allocation9 + $0x10] sm:$0xf]
    %v2092 = vld [vmem:[#allocation9 + $0x14] sm:$0xf]
    %v2093 = vld [vmem:[#allocation9 + $0x18] sm:$0xf]
    %v2094 = vld [vmem:[#allocation9 + $0x1c] sm:$0xf]
    %v2095 = vld [vmem:[#allocation9 + $0x20] sm:$0xf]
    %v2096 = vld [vmem:[#allocation9 + $0x24] sm:$0xf]
    %v2097 = vld [vmem:[#allocation9 + $0x28] sm:$0xf]
    %v2098 = vld [vmem:[#allocation9 + $0x2c] sm:$0xf]
    %v2099 = vld [vmem:[#allocation9 + $0x30] sm:$0xf]
    %v2100 = vld [vmem:[#allocation9 + $0x34] sm:$0xf]
    %v2101 = vld [vmem:[#allocation9 + $0x38] sm:$0xf]
    %v2102 = vld [vmem:[#allocation9 + $0x3c] sm:$0xf]
    %v2103 = vld [vmem:[#allocation10 + $0x3] sm:$0x1]
    %v2104 = vperm.slane %v2103, 0
    %v2121 = vunpack.c.l.b16 %v2087
    %v2122 = vunpack.c.l.b16 %v2088
    %v2123 = vunpack.c.l.b16 %v2089
    %v2124 = vunpack.c.l.b16 %v2090
    %v2125 = vunpack.c.l.b16 %v2091
    %v2126 = vunpack.c.l.b16 %v2092
    %v2127 = vunpack.c.l.b16 %v2093
    %v2128 = vunpack.c.l.b16 %v2094
    %v2129 = vunpack.c.l.b16 %v2095
    %v2130 = vunpack.c.l.b16 %v2096
    %v2131 = vunpack.c.l.b16 %v2097
    %v2132 = vunpack.c.l.b16 %v2098
    %v2133 = vunpack.c.l.b16 %v2099
    %v2134 = vunpack.c.l.b16 %v2100
    %v2135 = vunpack.c.l.b16 %v2101
    %v2136 = vunpack.c.l.b16 %v2102
    %v2137 = vpack.c.b16 %v2122, %v2121
    %v2138 = vpack.c.b16 %v2124, %v2123
    %v2139 = vpack.c.b16 %v2126, %v2125
    %v2140 = vpack.c.b16 %v2128, %v2127
    %v2141 = vpack.c.b16 %v2130, %v2129
    %v2142 = vpack.c.b16 %v2132, %v2131
    %v2143 = vpack.c.b16 %v2134, %v2133
    %v2144 = vpack.c.b16 %v2136, %v2135
    %2153 = vmatpush.bf16.msra.mxu0 %v2144
    %2154 = vmatpush.bf16.msra.mxu0 %v2143
    %2155 = vmatpush.bf16.msra.mxu0 %v2142
    %2156 = vmatpush.bf16.msra.mxu0 %v2141
    %2157 = vmatpush.bf16.msra.mxu0 %v2140
    %2158 = vmatpush.bf16.msra.mxu0 %v2139
    %2159 = vmatpush.bf16.msra.mxu0 %v2138
    %2160 = vmatpush.bf16.msra.mxu0 %v2137
    %2161 = vmatmul.bf16.gmra.mxu0 %v2086
    %v2162 = vpop.f32.mrf.mxu0
    %v2163 = vadd.f32 %v2104, %v2162
    %v2164 = vpop.f32.mrf.mxu0
    %v2165 = vadd.f32 %v2104, %v2164
    %2166 = vdwg.mxu0
    %2167 = vst [vmem:[%s13] sm:$0xff] %v2163
    %2168 = vst [vmem:[%s13 + $0x8] sm:$0xff] %v2165
    // Predicated region
    $region78: #{electra_for_custom_classification.1} parent=1 // pred_check
      _
    $region79: #{electra_for_custom_classification.1} parent=1 // pred_check_branch
      %2170 = sbr.rel (0) target = $region81
    $region80: #{electra_for_custom_classification.1} parent=1 // pred_region
      _
    $region81: #{electra_for_custom_classification.1} parent=1 // pred_fallthru
      _
    // Predicated region
    $region82: #{electra_for_custom_classification.1} parent=1 // pred_check
      _
    $region83: #{electra_for_custom_classification.1} parent=1 // pred_check_branch
      %2172 = sbr.rel (0) target = $region85
    $region84: #{electra_for_custom_classification.1} parent=1 // pred_region
      _
    $region85: #{electra_for_custom_classification.1} parent=1 // pred_fallthru
      _
    %2173 = vsyncpa [#allocation3], 1
    %2174 = vsyncpa [#allocation5], 1
    %2175 = vsyncpa [#allocation8], 1
    %2176 = vsyncpa [#allocation11], 1

</llo_original>
